<compile_context>
chip_gen: v7x
topology: tpu7x:2x2x1
jax: 0.10.0
libtpu: 0.0.40
codegen_flags: <defaults>
</compile_context>

<pallas_src>
import jax
import jax.numpy as jnp
from jax.experimental import pallas as pl
from jax.experimental.pallas import tpu as pltpu

LANE = 128


def _round_up(x, m):
    return ((x + m - 1) // m) * m


def chatbot_mlp_kernel(p0_ref, p1_ref, p2_ref,
                       w1_ref, b1_ref, w2_ref, b2_ref, w3_ref, b3_ref,
                       o_ref):
    """Fused fc1->relu->fc2->relu->fc3 on one (tb, .) batch tile.

    Pooled inputs arrive f32 (one tile per backbone); they are cast to bf16 on
    the VPU and concatenated in VMEM so fc1 is one full-depth K=3*Hm MXU dot.
    All MXU accumulation is f32; bias-add / ReLU run in f32 on the VPU.
    """
    x = jnp.concatenate(
        [p0_ref[...].astype(jnp.bfloat16),
         p1_ref[...].astype(jnp.bfloat16),
         p2_ref[...].astype(jnp.bfloat16)], axis=-1)

    h1 = jnp.dot(x, w1_ref[...], preferred_element_type=jnp.float32)
    h1 = jnp.maximum(h1 + b1_ref[...], 0.0)                      # relu(fc1)

    h2 = jnp.dot(h1.astype(jnp.bfloat16), w2_ref[...],
                 preferred_element_type=jnp.float32)
    h2 = jnp.maximum(h2 + b2_ref[...], 0.0)                      # relu(fc2)

    logits = jnp.dot(h2.astype(jnp.bfloat16), w3_ref[...],
                     preferred_element_type=jnp.float32)
    o_ref[...] = (logits + b3_ref[...]).astype(o_ref.dtype)      # fc3 (padded lanes)


def prepare_params(w1, b1, w2, b2, w3, b3):
    """One-time parameter prep (call once, reuse every forward call):
    bf16 weights / f32 biases, fc3 weight+bias zero-padded to 128 lanes."""
    H, C = w3.shape
    Cp = _round_up(C, LANE)
    w3p = jnp.pad(w3, ((0, 0), (0, Cp - C)))
    b3p = jnp.pad(b3, ((0, 0), (0, Cp - C)))
    return dict(
        w1=w1.astype(jnp.bfloat16), b1=b1.astype(jnp.float32),
        w2=w2.astype(jnp.bfloat16), b2=b2.astype(jnp.float32),
        w3=w3p.astype(jnp.bfloat16), b3=b3p.astype(jnp.float32),
        num_classes=C)


def chatbot_forward(pooled_list, params, *, tb=None):
    """pooled_list: list of 3 (B, Hm) f32 backbone pooler outputs.
    params: output of prepare_params(). Returns (B, C) f32 logits."""
    assert len(pooled_list) == 3
    B, Hm = pooled_list[0].shape
    H = 3 * Hm
    C = params["num_classes"]
    Cp = params["w3"].shape[1]
    assert params["w1"].shape == (H, H) and params["w2"].shape == (H, H)

    # Batch tile: multiple of 8 sublanes, large (per-grid-step overhead is
    # ~0.35us), but split so the grid has >=2 steps when possible so v7x's
    # two TensorCores both get work via the "parallel" grid axis.
    if tb is None:
        tb = min(1024, _round_up(B, 8))
        if B > 8 and _round_up(B, tb) == tb:          # would be a 1-step grid
            tb = _round_up((B + 1) // 2, 8)
    tb = max(8, _round_up(tb, 8))
    num_bt = pl.cdiv(B, tb)

    p0, p1, p2 = (jnp.asarray(p, jnp.float32) for p in pooled_list)

    batch_spec = pl.BlockSpec((tb, Hm), lambda i: (i, 0))

    def resident(shape):
        # Grid-invariant weight/bias tile: fetched once, so keep a single
        # pipeline buffer (a second buffer would only waste VMEM on v7x at
        # real backbone sizes).
        return pl.BlockSpec(shape, lambda i: (0, 0),
                            pipeline_mode=pl.Buffered(1))

    # Advisory cost + explicit scoped-VMEM limit (single-buffered weights,
    # double-buffered activation tiles, in-kernel f32 intermediates).
    flops = 2 * B * H * (2 * H + Cp)
    weight_bytes = 2 * H * (2 * H + Cp) + 4 * (2 * H + Cp)
    act_bytes = 2 * (3 * tb * Hm * 4 + tb * Cp * 4)
    scratch_bytes = tb * (2 * H + 8 * H + 4 * Cp)
    bytes_accessed = weight_bytes + 4 * B * H + 4 * B * Cp
    cost = pl.CostEstimate(flops=flops, transcendentals=0,
                           bytes_accessed=bytes_accessed)
    vmem_limit = int(min(max(2 * (weight_bytes + act_bytes + scratch_bytes),
                             32 * 1024 * 1024),
                         64 * 1024 * 1024))

    out = pl.pallas_call(
        chatbot_mlp_kernel,
        out_shape=jax.ShapeDtypeStruct((B, Cp), jnp.float32),
        grid=(num_bt,),
        in_specs=[
            batch_spec, batch_spec, batch_spec,       # pooled per backbone (f32)
            resident((H, H)),                         # w1 (bf16)
            resident((1, H)),                         # b1 (f32)
            resident((H, H)),                         # w2 (bf16)
            resident((1, H)),                         # b2 (f32)
            resident((H, Cp)),                        # w3 (bf16, lane-padded)
            resident((1, Cp)),                        # b3 (f32, lane-padded)
        ],
        out_specs=pl.BlockSpec((tb, Cp), lambda i: (i, 0)),
        compiler_params=pltpu.CompilerParams(
            dimension_semantics=("parallel",),        # shard batch tiles on v7x
            vmem_limit_bytes=vmem_limit),
        cost_estimate=cost,
    )(p0, p1, p2,
      params["w1"], params["b1"], params["w2"], params["b2"],
      params["w3"], params["b3"])

    return out[:, :C]


def init_linear(key, fan_in, fan_out):
    """Mimics nn.Linear default init (uniform +-1/sqrt(fan_in)).
    Weight returned already transposed to (in, out); bias as (1, out)."""
    kw, kb = jax.random.split(key)
    bound = 1.0 / jnp.sqrt(fan_in)
    w = jax.random.uniform(kw, (fan_in, fan_out), jnp.float32, -bound, bound)
    b = jax.random.uniform(kb, (1, fan_out), jnp.float32, -bound, bound)
    return w, b


if __name__ == "__main__":
    # Small synthetic shapes consistent with the module:
    # 3 backbone models, each hidden_size=128 -> hidden_size=384; 16 intents.
    B = 16
    per_model_hidden = 128
    num_models = 3
    H = per_model_hidden * num_models      # self.hidden_size
    C = 16                                 # len(data)

    key = jax.random.PRNGKey(0)
    k_pool, k1, k2, k3 = jax.random.split(key, 4)

    # TODO(synk): the 3 pretrained HF encoders + tokenizers (bert/roberta/
    # distilbert) have no Pallas equivalent; their pooler_output tensors are
    # synthesized here.
    pool_keys = jax.random.split(k_pool, num_models)
    pooled_outputs = [
        jax.random.normal(pk, (B, per_model_hidden), jnp.float32)
        for pk in pool_keys
    ]

    w1, b1 = init_linear(k1, H, H)
    w2, b2 = init_linear(k2, H, H)
    w3, b3 = init_linear(k3, H, C)

    params = prepare_params(w1, b1, w2, b2, w3, b3)   # one-time weight prep
    out = chatbot_forward(pooled_outputs, params)
    out = jax.block_until_ready(out)

    # Pure-JAX reference with the same bf16-weight / f32-accumulate recipe.
    pooled_cat = jnp.concatenate(pooled_outputs, axis=1)   # torch.cat(..., 1)
    h = jnp.dot(pooled_cat.astype(jnp.bfloat16), w1.astype(jnp.bfloat16),
                preferred_element_type=jnp.float32)
    h = jnp.maximum(h + b1, 0.0)
    h = jnp.dot(h.astype(jnp.bfloat16), w2.astype(jnp.bfloat16),
                preferred_element_type=jnp.float32)
    h = jnp.maximum(h + b2, 0.0)
    ref = jnp.dot(h.astype(jnp.bfloat16), w3.astype(jnp.bfloat16),
                  preferred_element_type=jnp.float32) + b3

    assert out.shape == (B, C), out.shape
    assert jnp.allclose(out, ref, atol=2e-2, rtol=2e-2), "mismatch vs reference"
    print("KERNEL_OK")
</pallas_src>

<mosaic_0001>
module attributes {stable_mosaic.version = 11 : i64} {
  func.func @chatbot_mlp_kernel(%arg0: i32, %arg1: memref<8x128xf32, #tpu.memory_space<vmem>>, %arg2: memref<8x128xf32, #tpu.memory_space<vmem>>, %arg3: memref<8x128xf32, #tpu.memory_space<vmem>>, %arg4: memref<384x384xbf16, #tpu.memory_space<vmem>>, %arg5: memref<1x384xf32, #tpu.memory_space<vmem>>, %arg6: memref<384x384xbf16, #tpu.memory_space<vmem>>, %arg7: memref<1x384xf32, #tpu.memory_space<vmem>>, %arg8: memref<384x128xbf16, #tpu.memory_space<vmem>>, %arg9: memref<1x128xf32, #tpu.memory_space<vmem>>, %arg10: memref<8x128xf32, #tpu.memory_space<vmem>>) attributes {dimension_semantics = [#tpu.dimension_semantics<parallel>], iteration_bounds = array<i64: 2>, scalar_prefetch = 0 : i64, scratch_operands = 0 : i64, tpu.core_type = #tpu.core_type<tc>, window_params = [{transform_indices = @transform_0, window_bounds = array<i64: 8, 128>}, {transform_indices = @transform_1, window_bounds = array<i64: 8, 128>}, {transform_indices = @transform_2, window_bounds = array<i64: 8, 128>}, {pipeline_mode = #tpu.pipeline_mode<synchronous>, transform_indices = @transform_3, window_bounds = array<i64: 384, 384>}, {pipeline_mode = #tpu.pipeline_mode<synchronous>, transform_indices = @transform_4, window_bounds = array<i64: 1, 384>}, {pipeline_mode = #tpu.pipeline_mode<synchronous>, transform_indices = @transform_5, window_bounds = array<i64: 384, 384>}, {pipeline_mode = #tpu.pipeline_mode<synchronous>, transform_indices = @transform_6, window_bounds = array<i64: 1, 384>}, {pipeline_mode = #tpu.pipeline_mode<synchronous>, transform_indices = @transform_7, window_bounds = array<i64: 384, 128>}, {pipeline_mode = #tpu.pipeline_mode<synchronous>, transform_indices = @transform_8, window_bounds = array<i64: 1, 128>}, {transform_indices = @transform_9, window_bounds = array<i64: 8, 128>}]} {
    %c0 = arith.constant 0 : index
    %c0_0 = arith.constant 0 : index
    %0 = vector.load %arg1[%c0, %c0_0] : memref<8x128xf32, #tpu.memory_space<vmem>>, vector<8x128xf32>
    %1 = arith.truncf %0 : vector<8x128xf32> to vector<8x128xbf16>
    %c0_1 = arith.constant 0 : index
    %c0_2 = arith.constant 0 : index
    %2 = vector.load %arg2[%c0_1, %c0_2] : memref<8x128xf32, #tpu.memory_space<vmem>>, vector<8x128xf32>
    %3 = arith.truncf %2 : vector<8x128xf32> to vector<8x128xbf16>
    %c0_3 = arith.constant 0 : index
    %c0_4 = arith.constant 0 : index
    %4 = vector.load %arg3[%c0_3, %c0_4] : memref<8x128xf32, #tpu.memory_space<vmem>>, vector<8x128xf32>
    %5 = arith.truncf %4 : vector<8x128xf32> to vector<8x128xbf16>
    %6 = tpu.concatenate %1, %3, %5 in 1 : vector<8x128xbf16>, vector<8x128xbf16>, vector<8x128xbf16> -> vector<8x384xbf16>
    %c0_5 = arith.constant 0 : index
    %c0_6 = arith.constant 0 : index
    %7 = vector.load %arg4[%c0_5, %c0_6] : memref<384x384xbf16, #tpu.memory_space<vmem>>, vector<384x384xbf16>
    %cst = arith.constant dense<0.000000e+00> : vector<8x384xf32>
    %8 = tpu.matmul %6, %7, %cst {dimension_numbers = #tpu.dot_dimension_numbers<[1], [0], [0], [1], [0, 0, 1, 1], [], []>} : vector<8x384xbf16>, vector<384x384xbf16>, vector<8x384xf32> -> vector<8x384xf32>
    %c0_7 = arith.constant 0 : index
    %c0_8 = arith.constant 0 : index
    %9 = vector.load %arg5[%c0_7, %c0_8] : memref<1x384xf32, #tpu.memory_space<vmem>>, vector<1x384xf32>
    %10 = vector.broadcast %9 : vector<1x384xf32> to vector<8x384xf32>
    %11 = arith.addf %8, %10 : vector<8x384xf32>
    %cst_9 = arith.constant 0.000000e+00 : f32
    %12 = vector.broadcast %cst_9 : f32 to vector<8x384xf32>
    %13 = arith.maximumf %11, %12 : vector<8x384xf32>
    %14 = arith.truncf %13 : vector<8x384xf32> to vector<8x384xbf16>
    %c0_10 = arith.constant 0 : index
    %c0_11 = arith.constant 0 : index
    %15 = vector.load %arg6[%c0_10, %c0_11] : memref<384x384xbf16, #tpu.memory_space<vmem>>, vector<384x384xbf16>
    %cst_12 = arith.constant dense<0.000000e+00> : vector<8x384xf32>
    %16 = tpu.matmul %14, %15, %cst_12 {dimension_numbers = #tpu.dot_dimension_numbers<[1], [0], [0], [1], [0, 0, 1, 1], [], []>} : vector<8x384xbf16>, vector<384x384xbf16>, vector<8x384xf32> -> vector<8x384xf32>
    %c0_13 = arith.constant 0 : index
    %c0_14 = arith.constant 0 : index
    %17 = vector.load %arg7[%c0_13, %c0_14] : memref<1x384xf32, #tpu.memory_space<vmem>>, vector<1x384xf32>
    %18 = vector.broadcast %17 : vector<1x384xf32> to vector<8x384xf32>
    %19 = arith.addf %16, %18 : vector<8x384xf32>
    %cst_15 = arith.constant 0.000000e+00 : f32
    %20 = vector.broadcast %cst_15 : f32 to vector<8x384xf32>
    %21 = arith.maximumf %19, %20 : vector<8x384xf32>
    %22 = arith.truncf %21 : vector<8x384xf32> to vector<8x384xbf16>
    %c0_16 = arith.constant 0 : index
    %c0_17 = arith.constant 0 : index
    %23 = vector.load %arg8[%c0_16, %c0_17] : memref<384x128xbf16, #tpu.memory_space<vmem>>, vector<384x128xbf16>
    %cst_18 = arith.constant dense<0.000000e+00> : vector<8x128xf32>
    %24 = tpu.matmul %22, %23, %cst_18 {dimension_numbers = #tpu.dot_dimension_numbers<[1], [0], [0], [1], [0, 0, 1, 1], [], []>} : vector<8x384xbf16>, vector<384x128xbf16>, vector<8x128xf32> -> vector<8x128xf32>
    %c0_19 = arith.constant 0 : index
    %c0_20 = arith.constant 0 : index
    %25 = vector.load %arg9[%c0_19, %c0_20] : memref<1x128xf32, #tpu.memory_space<vmem>>, vector<1x128xf32>
    %26 = vector.broadcast %25 : vector<1x128xf32> to vector<8x128xf32>
    %27 = arith.addf %24, %26 : vector<8x128xf32>
    %c0_21 = arith.constant 0 : index
    %c0_22 = arith.constant 0 : index
    %28 = vector.load %arg10[%c0_21, %c0_22] : memref<8x128xf32, #tpu.memory_space<vmem>>, vector<8x128xf32>
    tpu.vector_store %arg10[%c0_21, %c0_22], %27 {strides = array<i32>} : memref<8x128xf32, #tpu.memory_space<vmem>>, vector<8x128xf32>,
    return
  }
  func.func @transform_0(%arg0: i32) -> (i32, i32) {
    %c0_i32 = arith.constant 0 : i32
    %c0_i32_0 = arith.constant 0 : i32
    return %arg0, %c0_i32 : i32, i32
  }
  func.func @transform_1(%arg0: i32) -> (i32, i32) {
    %c0_i32 = arith.constant 0 : i32
    %c0_i32_0 = arith.constant 0 : i32
    return %arg0, %c0_i32 : i32, i32
  }
  func.func @transform_2(%arg0: i32) -> (i32, i32) {
    %c0_i32 = arith.constant 0 : i32
    %c0_i32_0 = arith.constant 0 : i32
    return %arg0, %c0_i32 : i32, i32
  }
  func.func @transform_3(%arg0: i32) -> (i32, i32) {
    %c0_i32 = arith.constant 0 : i32
    %c0_i32_0 = arith.constant 0 : i32
    %c0_i32_1 = arith.constant 0 : i32
    return %c0_i32, %c0_i32_0 : i32, i32
  }
  func.func @transform_4(%arg0: i32) -> (i32, i32) {
    %c0_i32 = arith.constant 0 : i32
    %c0_i32_0 = arith.constant 0 : i32
    %c0_i32_1 = arith.constant 0 : i32
    return %c0_i32, %c0_i32_0 : i32, i32
  }
  func.func @transform_5(%arg0: i32) -> (i32, i32) {
    %c0_i32 = arith.constant 0 : i32
    %c0_i32_0 = arith.constant 0 : i32
    %c0_i32_1 = arith.constant 0 : i32
    return %c0_i32, %c0_i32_0 : i32, i32
  }
  func.func @transform_6(%arg0: i32) -> (i32, i32) {
    %c0_i32 = arith.constant 0 : i32
    %c0_i32_0 = arith.constant 0 : i32
    %c0_i32_1 = arith.constant 0 : i32
    return %c0_i32, %c0_i32_0 : i32, i32
  }
  func.func @transform_7(%arg0: i32) -> (i32, i32) {
    %c0_i32 = arith.constant 0 : i32
    %c0_i32_0 = arith.constant 0 : i32
    %c0_i32_1 = arith.constant 0 : i32
    return %c0_i32, %c0_i32_0 : i32, i32
  }
  func.func @transform_8(%arg0: i32) -> (i32, i32) {
    %c0_i32 = arith.constant 0 : i32
    %c0_i32_0 = arith.constant 0 : i32
    %c0_i32_1 = arith.constant 0 : i32
    return %c0_i32, %c0_i32_0 : i32, i32
  }
  func.func @transform_9(%arg0: i32) -> (i32, i32) {
    %c0_i32 = arith.constant 0 : i32
    %c0_i32_0 = arith.constant 0 : i32
    return %arg0, %c0_i32 : i32, i32
  }
}

</mosaic_0001>

<llo_original>
// kernel: tpu_custom_call.1
$region0: #{tpu_custom_call.1}
  #allocation0 [shape = 'u32[]', space=smem, size = 0x4, offset = 0x4, fixed_abs, tag = 'smem constant byte address 0x4 - core index']
  #allocation1 [shape = 'u32[144,128]{1,0:T(1,128)}', space=vmem, size = 0x12000, scoped, tag = 'internal scratch']
  %s0 = inlined_call_operand.hbm [shape: f32[16,128], index: 0, kind: input, shape index: {}]
  %s1 = inlined_call_operand.hbm [shape: f32[16,128], index: 1, kind: input, shape index: {}]
  %s2 = inlined_call_operand.hbm [shape: f32[16,128], index: 2, kind: input, shape index: {}]
  %s3 = inlined_call_operand.hbm [shape: bf16[384,384], index: 3, kind: input, shape index: {}]
  %s4 = inlined_call_operand.vmem [shape: f32[1,384], index: 4, kind: input, shape index: {}]
  %s5 = inlined_call_operand.hbm [shape: bf16[384,384], index: 5, kind: input, shape index: {}]
  %s6 = inlined_call_operand.vmem [shape: f32[1,384], index: 6, kind: input, shape index: {}]
  %s7 = inlined_call_operand.hbm [shape: bf16[384,128], index: 7, kind: input, shape index: {}]
  %s8 = inlined_call_operand.vmem [shape: f32[1,128], index: 8, kind: input, shape index: {}]
  %s9 = inlined_call_operand.hbm [shape: f32[16,128], index: 9, kind: output, shape index: {}]
  %s10 = sld [smem:[#allocation0]]
  $region93: #{tpu_custom_call.1} parent=0
    _
  %s12 = ssub.s32 1, %s10
  %s13 = scalar_select 0, %s12, %s10
  $region1: #{tpu_custom_call.1} parent=0
    #allocation2 [shape = 'u8[8192]{0}', space=vmem, size = 0x2000, scoped, tag = 'input window, operand 0']
    #allocation3 [shape = 's32[2]{0}', space=sflag, size = 0x8, scoped, tag = 'scoped memory for tpu_custom_call.1']
    #allocation4 [shape = 's32[2]{0}', space=sflag, size = 0x8, scoped, tag = 'scoped memory for tpu_custom_call.1']
    #allocation5 [shape = 'u8[8192]{0}', space=vmem, size = 0x2000, scoped, tag = 'input window, operand 1']
    #allocation6 [shape = 's32[2]{0}', space=sflag, size = 0x8, scoped, tag = 'scoped memory for tpu_custom_call.1']
    #allocation7 [shape = 'u8[8192]{0}', space=vmem, size = 0x2000, scoped, tag = 'input window, operand 2']
    #allocation8 [shape = 'u8[294912]{0}', space=vmem, size = 0x48000, scoped, tag = 'input window, operand 3, single buffered']
    #allocation9 [shape = 's32[1]{0}', space=sflag, size = 0x4, scoped, tag = 'scoped memory for tpu_custom_call.1']
    #allocation10 [shape = 'u8[294912]{0}', space=vmem, size = 0x48000, scoped, tag = 'input window, operand 5, single buffered']
    #allocation11 [shape = 'u8[98304]{0}', space=vmem, size = 0x18000, scoped, tag = 'input window, operand 7, single buffered']
    #allocation12 [shape = 's32[1]{0}', space=sflag, size = 0x4, scoped, tag = 'scoped memory for tpu_custom_call.1']
    #allocation13 [shape = 'u8[8192]{0}', space=vmem, size = 0x2000, scoped, tag = 'output window, operand 0']
    %14 = vsyncpa [#allocation3], 0
    %s15 = scalar_lea.sflag [#allocation3], 1
    %16 = vsyncpa %s15, 0
    %17 = vsyncpa [#allocation6], 0
    %s18 = scalar_lea.sflag [#allocation6], 1
    %19 = vsyncpa %s18, 0
    %20 = vsyncpa [#allocation9], 0
    %21 = vsyncpa [#allocation12], 0
    %22 = vsyncpa [#allocation4], 0
    %s23 = scalar_lea.sflag [#allocation4], 1
    %24 = vsyncpa %s23, 0
    loop: start=0, step=1, limit=4
    $region2: #{tpu_custom_call.1} parent=1 // loop_pre_header
      _
    $region3: #{tpu_custom_call.1} parent=1 // loop_header
      %s26 = sphi 0, %s30
      %p27 = scmp.ge.s32.totalorder %s26, 4
      %s36 = sphi 0, %s38
      %s39 = sphi 0, %s36
      %s40 = sphi 0, %s39
      %s56 = sphi 0, %s40
      %s62 = sphi 0, %s64
      %s65 = sphi 0, %s62
      %s66 = sphi 0, %s65
      %s82 = sphi 0, %s66
      %s88 = sphi 0, %s90
      %s91 = sphi 0, %s88
      %s92 = sphi 0, %s91
      %s108 = sphi 0, %s92
      %s112 = sphi 0, %s112
      %s114 = sphi 0, %s112
      %s115 = sphi 0, %s114
      %s129 = sphi 0, %s115
      %s133 = sphi 0, %s133
      %s135 = sphi 0, %s133
      %s136 = sphi 0, %s135
      %s150 = sphi 0, %s136
      %s154 = sphi 0, %s154
      %s156 = sphi 0, %s154
      %s157 = sphi 0, %s156
      %s171 = sphi 0, %s157
      %s175 = sphi 0, %s175
      %s177 = sphi 0, %s175
      %s178 = sphi 0, %s177
      %s192 = sphi 0, %s178
      %s196 = sphi 0, %s196
      %s198 = sphi 0, %s196
      %s199 = sphi 0, %s198
      %s213 = sphi 0, %s199
      %s217 = sphi 0, %s217
      %s219 = sphi 0, %s217
      %s220 = sphi 0, %s219
      %s234 = sphi 0, %s220
      %s240 = sphi 0, %s242
      %s243 = sphi 0, %s240
      %s244 = sphi 0, %s243
      %s260 = sphi 0, %s244
    $region4: #{tpu_custom_call.1} parent=1 // loop_header_branch
      %29 = sbr.rel (%p27) target = $region8
    $region5: #{tpu_custom_call.1} parent=1 // loop_body
      %s31 = ssub.s32 %s26, 1
      %s32 = ssub.s32 %s26, 2
      %s33 = sadd.s32 %s26, 1
      %s34 = ssub.s32 %s26, %s33
      %p35 = scmp.eq.s32.totalorder %s34, 0
      %s37 = sadd.s32 %s36, 1
      %s38 = scalar_select %p35, %s36, %s37
      %p41 = pneg %p35
      %p42 = scmp.eq.s32.totalorder %s26, 1
      %p43 = por %p41, %p42
      %p44 = scmp.ne.s32.totalorder %s36, %s39
      %p45 = scmp.eq.s32.totalorder %s26, 0
      %p46 = por %p44, %p45
      %p47 = scmp.ne.s32.totalorder %s36, %s39
      %p48 = scmp.eq.s32.totalorder %s31, 1
      %p49 = por %p47, %p48
      %p50 = scmp.ne.s32.totalorder %s39, %s40
      %p51 = scmp.eq.s32.totalorder %s31, 0
      %p52 = por %p50, %p51
      %p53 = scmp.ne.s32.totalorder %s39, %s40
      %p54 = scmp.eq.s32.totalorder %s32, 1
      %p55 = por %p53, %p54
      %p57 = scmp.ne.s32.totalorder %s40, %s56
      %p58 = scmp.eq.s32.totalorder %s32, 0
      %p59 = por %p57, %p58
      %s60 = ssub.s32 %s26, %s33
      %p61 = scmp.eq.s32.totalorder %s60, 0
      %s63 = sadd.s32 %s62, 1
      %s64 = scalar_select %p61, %s62, %s63
      %p67 = pneg %p61
      %p68 = scmp.eq.s32.totalorder %s26, 1
      %p69 = por %p67, %p68
      %p70 = scmp.ne.s32.totalorder %s62, %s65
      %p71 = scmp.eq.s32.totalorder %s26, 0
      %p72 = por %p70, %p71
      %p73 = scmp.ne.s32.totalorder %s62, %s65
      %p74 = scmp.eq.s32.totalorder %s31, 1
      %p75 = por %p73, %p74
      %p76 = scmp.ne.s32.totalorder %s65, %s66
      %p77 = scmp.eq.s32.totalorder %s31, 0
      %p78 = por %p76, %p77
      %p79 = scmp.ne.s32.totalorder %s65, %s66
      %p80 = scmp.eq.s32.totalorder %s32, 1
      %p81 = por %p79, %p80
      %p83 = scmp.ne.s32.totalorder %s66, %s82
      %p84 = scmp.eq.s32.totalorder %s32, 0
      %p85 = por %p83, %p84
      %s86 = ssub.s32 %s26, %s33
      %p87 = scmp.eq.s32.totalorder %s86, 0
      %s89 = sadd.s32 %s88, 1
      %s90 = scalar_select %p87, %s88, %s89
      %p93 = pneg %p87
      %p94 = scmp.eq.s32.totalorder %s26, 1
      %p95 = por %p93, %p94
      %p96 = scmp.ne.s32.totalorder %s88, %s91
      %p97 = scmp.eq.s32.totalorder %s26, 0
      %p98 = por %p96, %p97
      %p99 = scmp.ne.s32.totalorder %s88, %s91
      %p100 = scmp.eq.s32.totalorder %s31, 1
      %p101 = por %p99, %p100
      %p102 = scmp.ne.s32.totalorder %s91, %s92
      %p103 = scmp.eq.s32.totalorder %s31, 0
      %p104 = por %p102, %p103
      %p105 = scmp.ne.s32.totalorder %s91, %s92
      %p106 = scmp.eq.s32.totalorder %s32, 1
      %p107 = por %p105, %p106
      %p109 = scmp.ne.s32.totalorder %s92, %s108
      %p110 = scmp.eq.s32.totalorder %s32, 0
      %p111 = por %p109, %p110
      %s113 = sadd.s32 %s112, 1
      %p116 = scmp.eq.s32.totalorder %s26, 1
      %p117 = scmp.ne.s32.totalorder %s112, %s114
      %p118 = scmp.eq.s32.totalorder %s26, 0
      %p119 = por %p117, %p118
      %p120 = scmp.ne.s32.totalorder %s112, %s114
      %p121 = scmp.eq.s32.totalorder %s31, 1
      %p122 = por %p120, %p121
      %p123 = scmp.ne.s32.totalorder %s114, %s115
      %p124 = scmp.eq.s32.totalorder %s31, 0
      %p125 = por %p123, %p124
      %p126 = scmp.ne.s32.totalorder %s114, %s115
      %p127 = scmp.eq.s32.totalorder %s32, 1
      %p128 = por %p126, %p127
      %p130 = scmp.ne.s32.totalorder %s115, %s129
      %p131 = scmp.eq.s32.totalorder %s32, 0
      %p132 = por %p130, %p131
      %s134 = sadd.s32 %s133, 1
      %p137 = scmp.eq.s32.totalorder %s26, 1
      %p138 = scmp.ne.s32.totalorder %s133, %s135
      %p139 = scmp.eq.s32.totalorder %s26, 0
      %p140 = por %p138, %p139
      %p141 = scmp.ne.s32.totalorder %s133, %s135
      %p142 = scmp.eq.s32.totalorder %s31, 1
      %p143 = por %p141, %p142
      %p144 = scmp.ne.s32.totalorder %s135, %s136
      %p145 = scmp.eq.s32.totalorder %s31, 0
      %p146 = por %p144, %p145
      %p147 = scmp.ne.s32.totalorder %s135, %s136
      %p148 = scmp.eq.s32.totalorder %s32, 1
      %p149 = por %p147, %p148
      %p151 = scmp.ne.s32.totalorder %s136, %s150
      %p152 = scmp.eq.s32.totalorder %s32, 0
      %p153 = por %p151, %p152
      %s155 = sadd.s32 %s154, 1
      %p158 = scmp.eq.s32.totalorder %s26, 1
      %p159 = scmp.ne.s32.totalorder %s154, %s156
      %p160 = scmp.eq.s32.totalorder %s26, 0
      %p161 = por %p159, %p160
      %p162 = scmp.ne.s32.totalorder %s154, %s156
      %p163 = scmp.eq.s32.totalorder %s31, 1
      %p164 = por %p162, %p163
      %p165 = scmp.ne.s32.totalorder %s156, %s157
      %p166 = scmp.eq.s32.totalorder %s31, 0
      %p167 = por %p165, %p166
      %p168 = scmp.ne.s32.totalorder %s156, %s157
      %p169 = scmp.eq.s32.totalorder %s32, 1
      %p170 = por %p168, %p169
      %p172 = scmp.ne.s32.totalorder %s157, %s171
      %p173 = scmp.eq.s32.totalorder %s32, 0
      %p174 = por %p172, %p173
      %s176 = sadd.s32 %s175, 1
      %p179 = scmp.eq.s32.totalorder %s26, 1
      %p180 = scmp.ne.s32.totalorder %s175, %s177
      %p181 = scmp.eq.s32.totalorder %s26, 0
      %p182 = por %p180, %p181
      %p183 = scmp.ne.s32.totalorder %s175, %s177
      %p184 = scmp.eq.s32.totalorder %s31, 1
      %p185 = por %p183, %p184
      %p186 = scmp.ne.s32.totalorder %s177, %s178
      %p187 = scmp.eq.s32.totalorder %s31, 0
      %p188 = por %p186, %p187
      %p189 = scmp.ne.s32.totalorder %s177, %s178
      %p190 = scmp.eq.s32.totalorder %s32, 1
      %p191 = por %p189, %p190
      %p193 = scmp.ne.s32.totalorder %s178, %s192
      %p194 = scmp.eq.s32.totalorder %s32, 0
      %p195 = por %p193, %p194
      %s197 = sadd.s32 %s196, 1
      %p200 = scmp.eq.s32.totalorder %s26, 1
      %p201 = scmp.ne.s32.totalorder %s196, %s198
      %p202 = scmp.eq.s32.totalorder %s26, 0
      %p203 = por %p201, %p202
      %p204 = scmp.ne.s32.totalorder %s196, %s198
      %p205 = scmp.eq.s32.totalorder %s31, 1
      %p206 = por %p204, %p205
      %p207 = scmp.ne.s32.totalorder %s198, %s199
      %p208 = scmp.eq.s32.totalorder %s31, 0
      %p209 = por %p207, %p208
      %p210 = scmp.ne.s32.totalorder %s198, %s199
      %p211 = scmp.eq.s32.totalorder %s32, 1
      %p212 = por %p210, %p211
      %p214 = scmp.ne.s32.totalorder %s199, %s213
      %p215 = scmp.eq.s32.totalorder %s32, 0
      %p216 = por %p214, %p215
      %s218 = sadd.s32 %s217, 1
      %p221 = scmp.eq.s32.totalorder %s26, 1
      %p222 = scmp.ne.s32.totalorder %s217, %s219
      %p223 = scmp.eq.s32.totalorder %s26, 0
      %p224 = por %p222, %p223
      %p225 = scmp.ne.s32.totalorder %s217, %s219
      %p226 = scmp.eq.s32.totalorder %s31, 1
      %p227 = por %p225, %p226
      %p228 = scmp.ne.s32.totalorder %s219, %s220
      %p229 = scmp.eq.s32.totalorder %s31, 0
      %p230 = por %p228, %p229
      %p231 = scmp.ne.s32.totalorder %s219, %s220
      %p232 = scmp.eq.s32.totalorder %s32, 1
      %p233 = por %p231, %p232
      %p235 = scmp.ne.s32.totalorder %s220, %s234
      %p236 = scmp.eq.s32.totalorder %s32, 0
      %p237 = por %p235, %p236
      %s238 = ssub.s32 %s26, %s33
      %p239 = scmp.eq.s32.totalorder %s238, 0
      %s241 = sadd.s32 %s240, 1
      %s242 = scalar_select %p239, %s240, %s241
      %p245 = pneg %p239
      %p246 = scmp.eq.s32.totalorder %s26, 1
      %p247 = por %p245, %p246
      %p248 = scmp.ne.s32.totalorder %s240, %s243
      %p249 = scmp.eq.s32.totalorder %s26, 0
      %p250 = por %p248, %p249
      %p251 = scmp.ne.s32.totalorder %s240, %s243
      %p252 = scmp.eq.s32.totalorder %s31, 1
      %p253 = por %p251, %p252
      %p254 = scmp.ne.s32.totalorder %s243, %s244
      %p255 = scmp.eq.s32.totalorder %s31, 0
      %p256 = por %p254, %p255
      %p257 = scmp.ne.s32.totalorder %s243, %s244
      %p258 = scmp.eq.s32.totalorder %s32, 1
      %p259 = por %p257, %p258
      %p261 = scmp.ne.s32.totalorder %s244, %s260
      %p262 = scmp.eq.s32.totalorder %s32, 0
      %p263 = por %p261, %p262
      %p264 = scmp.le.s32.totalorder 1, %s26
      %p265 = scmp.lt.s32.totalorder %s26, 3
      %p266 = pnand %p264, %p265
      %p267 = pneg %p266
      // Predicated region
      $region9: #{tpu_custom_call.1} parent=5 // pred_check
        _
      $region10: #{tpu_custom_call.1} parent=5 // pred_check_branch
        %269 = sbr.rel (%p266) target = $region12
      $region11: #{tpu_custom_call.1} parent=5 // pred_region
        %s270 = ssub.s32 %s26, 1
        // Predicated region
        $region13: #{tpu_custom_call.1} parent=11 // pred_check
          %p271 = pneg %p125
        $region14: #{tpu_custom_call.1} parent=11 // pred_check_branch
          %273 = sbr.rel (%p271) target = $region16
        $region15: #{tpu_custom_call.1} parent=11 // pred_region
          %s275 = ssub.s32 9216, 9216
          %276 = vsyncadd [#allocation9], %s275
          %s277 = sshll.u32 [#allocation8], 4
          %s278 = int_to_ptr.vmem [resolvable:$true] %s277
          %283 = dma.hbm_to_vmem [thread:$0]  %s3, 9216, %s278, [#allocation9], 192, 192, 12
        $region16: #{tpu_custom_call.1} parent=11 // pred_fallthru
          _
        // Predicated region
        $region17: #{tpu_custom_call.1} parent=11 // pred_check
          %p284 = pneg %p146
        $region18: #{tpu_custom_call.1} parent=11 // pred_check_branch
          %286 = sbr.rel (%p284) target = $region20
        $region19: #{tpu_custom_call.1} parent=11 // pred_region
          _
        $region20: #{tpu_custom_call.1} parent=11 // pred_fallthru
          _
        // Predicated region
        $region21: #{tpu_custom_call.1} parent=11 // pred_check
          %p287 = pneg %p167
        $region22: #{tpu_custom_call.1} parent=11 // pred_check_branch
          %289 = sbr.rel (%p287) target = $region24
        $region23: #{tpu_custom_call.1} parent=11 // pred_region
          %s291 = ssub.s32 9216, 9216
          %292 = vsyncadd [#allocation9], %s291
          %s293 = sshll.u32 [#allocation10], 4
          %s294 = int_to_ptr.vmem [resolvable:$true] %s293
          %299 = dma.hbm_to_vmem [thread:$0]  %s5, 9216, %s294, [#allocation9], 192, 192, 12
        $region24: #{tpu_custom_call.1} parent=11 // pred_fallthru
          _
        // Predicated region
        $region25: #{tpu_custom_call.1} parent=11 // pred_check
          %p300 = pneg %p188
        $region26: #{tpu_custom_call.1} parent=11 // pred_check_branch
          %302 = sbr.rel (%p300) target = $region28
        $region27: #{tpu_custom_call.1} parent=11 // pred_region
          _
        $region28: #{tpu_custom_call.1} parent=11 // pred_fallthru
          _
        // Predicated region
        $region29: #{tpu_custom_call.1} parent=11 // pred_check
          %p303 = pneg %p209
        $region30: #{tpu_custom_call.1} parent=11 // pred_check_branch
          %305 = sbr.rel (%p303) target = $region32
        $region31: #{tpu_custom_call.1} parent=11 // pred_region
          %s307 = ssub.s32 3072, 3072
          %308 = vsyncadd [#allocation12], %s307
          %s309 = sshll.u32 [#allocation11], 4
          %s310 = int_to_ptr.vmem [resolvable:$true] %s309
          %315 = dma.hbm_to_vmem [thread:$0]  %s7, 3072, %s310, [#allocation12], 64, 64, 4
        $region32: #{tpu_custom_call.1} parent=11 // pred_fallthru
          _
        // Predicated region
        $region33: #{tpu_custom_call.1} parent=11 // pred_check
          %p316 = pneg %p230
        $region34: #{tpu_custom_call.1} parent=11 // pred_check_branch
          %318 = sbr.rel (%p316) target = $region36
        $region35: #{tpu_custom_call.1} parent=11 // pred_region
          _
        $region36: #{tpu_custom_call.1} parent=11 // pred_fallthru
          _
      $region12: #{tpu_custom_call.1} parent=5 // pred_fallthru
        _
      %p319 = scmp.lt.s32.totalorder %s26, 2
      // Predicated region
      $region37: #{tpu_custom_call.1} parent=5 // pred_check
        %p320 = pneg %p319
      $region38: #{tpu_custom_call.1} parent=5 // pred_check_branch
        %322 = sbr.rel (%p320) target = $region40
      $region39: #{tpu_custom_call.1} parent=5 // pred_region
        // Predicated region
        $region41: #{tpu_custom_call.1} parent=39 // pred_check
          %p323 = pneg %p46
        $region42: #{tpu_custom_call.1} parent=39 // pred_check_branch
          %325 = sbr.rel (%p323) target = $region44
        $region43: #{tpu_custom_call.1} parent=39 // pred_region
          %s326 = sand.u32 %s36, 1
          %s327 = scalar_lea.sflag [#allocation3], %s326
          %s328 = sand.u32 %s36, 1
          %s329 = smul.addr %s328, 8
          %s330 = scalar_lea.vmem [#allocation2], %s329
          %s332 = ssub.s32 128, 128
          %333 = vsyncadd %s327, %s332
          %s334 = smul.addr %s26, 128
          %s335 = scalar_lea.hbm %s0, %s334
          %s337 = sshll.u32 %s330, 4
          %s338 = int_to_ptr.vmem [resolvable:$true] %s337
          %340 = dma.hbm_to_vmem [thread:$0]  %s335, 128, %s338, %s327
        $region44: #{tpu_custom_call.1} parent=39 // pred_fallthru
          _
        // Predicated region
        $region45: #{tpu_custom_call.1} parent=39 // pred_check
          %p341 = pneg %p72
        $region46: #{tpu_custom_call.1} parent=39 // pred_check_branch
          %343 = sbr.rel (%p341) target = $region48
        $region47: #{tpu_custom_call.1} parent=39 // pred_region
          %s344 = sand.u32 %s26, 1
          %s345 = scalar_lea.sflag [#allocation6], %s344
          %s346 = sand.u32 %s62, 1
          %s347 = smul.addr %s346, 8
          %s348 = scalar_lea.vmem [#allocation5], %s347
          %s350 = ssub.s32 128, 128
          %351 = vsyncadd %s345, %s350
          %s352 = smul.addr %s26, 128
          %s353 = scalar_lea.hbm %s1, %s352
          %s355 = sshll.u32 %s348, 4
          %s356 = int_to_ptr.vmem [resolvable:$true] %s355
          %358 = dma.hbm_to_vmem [thread:$0]  %s353, 128, %s356, %s345
        $region48: #{tpu_custom_call.1} parent=39 // pred_fallthru
          _
        // Predicated region
        $region49: #{tpu_custom_call.1} parent=39 // pred_check
          %p359 = pneg %p98
        $region50: #{tpu_custom_call.1} parent=39 // pred_check_branch
          %361 = sbr.rel (%p359) target = $region52
        $region51: #{tpu_custom_call.1} parent=39 // pred_region
          %s362 = sand.u32 %s26, 1
          %s363 = scalar_lea.sflag [#allocation6], %s362
          %s364 = sand.u32 %s88, 1
          %s365 = smul.addr %s364, 8
          %s366 = scalar_lea.vmem [#allocation7], %s365
          %s368 = ssub.s32 128, 128
          %369 = vsyncadd %s363, %s368
          %s370 = smul.addr %s26, 128
          %s371 = scalar_lea.hbm %s2, %s370
          %s373 = sshll.u32 %s366, 4
          %s374 = int_to_ptr.vmem [resolvable:$true] %s373
          %376 = dma.hbm_to_vmem [thread:$0]  %s371, 128, %s374, %s363
        $region52: #{tpu_custom_call.1} parent=39 // pred_fallthru
          _
      $region40: #{tpu_custom_call.1} parent=5 // pred_fallthru
        _
      %p377 = scmp.le.s32.totalorder 1, %s26
      %p378 = scmp.lt.s32.totalorder %s26, 3
      %p379 = pnand %p377, %p378
      %p380 = pneg %p379
      // Predicated region
      $region53: #{tpu_custom_call.1} parent=5 // pred_check
        _
      $region54: #{tpu_custom_call.1} parent=5 // pred_check_branch
        %382 = sbr.rel (%p379) target = $region56
      $region55: #{tpu_custom_call.1} parent=5 // pred_region
        %s383 = ssub.s32 %s26, 1
        %s384 = sand.u32 %s39, 1
        %s385 = scalar_lea.sflag [#allocation3], %s384
        %s386 = sand.u32 %s39, 1
        %s387 = smul.addr %s386, 8
        %s388 = scalar_lea.vmem [#allocation2], %s387
        // Predicated region
        $region57: #{tpu_custom_call.1} parent=55 // pred_check
          %p389 = pneg %p52
        $region58: #{tpu_custom_call.1} parent=55 // pred_check_branch
          %391 = sbr.rel (%p389) target = $region60
        $region59: #{tpu_custom_call.1} parent=55 // pred_region
          %392 = dma.done %s385, 128
        $region60: #{tpu_custom_call.1} parent=55 // pred_fallthru
          _
        %s393 = sand.u32 %s31, 1
        %s394 = scalar_lea.sflag [#allocation6], %s393
        %s395 = sand.u32 %s65, 1
        %s396 = smul.addr %s395, 8
        %s397 = scalar_lea.vmem [#allocation5], %s396
        // Predicated region
        $region61: #{tpu_custom_call.1} parent=55 // pred_check
          %p398 = pneg %p78
        $region62: #{tpu_custom_call.1} parent=55 // pred_check_branch
          %400 = sbr.rel (%p398) target = $region64
        $region63: #{tpu_custom_call.1} parent=55 // pred_region
          %401 = dma.done %s394, 128
        $region64: #{tpu_custom_call.1} parent=55 // pred_fallthru
          _
        %s402 = sand.u32 %s31, 1
        %s403 = scalar_lea.sflag [#allocation6], %s402
        %s404 = sand.u32 %s91, 1
        %s405 = smul.addr %s404, 8
        %s406 = scalar_lea.vmem [#allocation7], %s405
        // Predicated region
        $region65: #{tpu_custom_call.1} parent=55 // pred_check
          %p407 = pneg %p104
        $region66: #{tpu_custom_call.1} parent=55 // pred_check_branch
          %409 = sbr.rel (%p407) target = $region68
        $region67: #{tpu_custom_call.1} parent=55 // pred_region
          %410 = dma.done %s403, 128
        $region68: #{tpu_custom_call.1} parent=55 // pred_fallthru
          _
        // Predicated region
        $region69: #{tpu_custom_call.1} parent=55 // pred_check
          %p411 = pneg %p125
        $region70: #{tpu_custom_call.1} parent=55 // pred_check_branch
          %413 = sbr.rel (%p411) target = $region72
        $region71: #{tpu_custom_call.1} parent=55 // pred_region
          %414 = dma.done [#allocation9], 9216
        $region72: #{tpu_custom_call.1} parent=55 // pred_fallthru
          _
        // Predicated region
        $region73: #{tpu_custom_call.1} parent=55 // pred_check
          %p415 = pneg %p167
        $region74: #{tpu_custom_call.1} parent=55 // pred_check_branch
          %417 = sbr.rel (%p415) target = $region76
        $region75: #{tpu_custom_call.1} parent=55 // pred_region
          %418 = dma.done [#allocation9], 9216
        $region76: #{tpu_custom_call.1} parent=55 // pred_fallthru
          _
        // Predicated region
        $region77: #{tpu_custom_call.1} parent=55 // pred_check
          %p419 = pneg %p209
        $region78: #{tpu_custom_call.1} parent=55 // pred_check_branch
          %421 = sbr.rel (%p419) target = $region80
        $region79: #{tpu_custom_call.1} parent=55 // pred_region
          %422 = dma.done [#allocation12], 3072
        $region80: #{tpu_custom_call.1} parent=55 // pred_fallthru
          _
        %s423 = sand.u32 %s39, 1
        %s424 = scalar_lea.sflag [#allocation3], %s423
        %s425 = sand.u32 %s39, 1
        %s426 = smul.addr %s425, 8
        %s427 = scalar_lea.vmem [#allocation2], %s426
        %p428 = pneg %p52
        %p429 = pneg %p49
        %s430 = sand.u32 %s31, 1
        %s431 = scalar_lea.sflag [#allocation6], %s430
        %s432 = sand.u32 %s65, 1
        %s433 = smul.addr %s432, 8
        %s434 = scalar_lea.vmem [#allocation5], %s433
        %p435 = pneg %p78
        %p436 = pneg %p75
        %s437 = sand.u32 %s31, 1
        %s438 = scalar_lea.sflag [#allocation6], %s437
        %s439 = sand.u32 %s91, 1
        %s440 = smul.addr %s439, 8
        %s441 = scalar_lea.vmem [#allocation7], %s440
        %p442 = pneg %p104
        %p443 = pneg %p101
        %p444 = pneg %p125
        %p445 = pneg %p122
        %p446 = pneg %p146
        %p447 = pneg %p143
        %p448 = pneg %p167
        %p449 = pneg %p164
        %p450 = pneg %p188
        %p451 = pneg %p185
        %p452 = pneg %p209
        %p453 = pneg %p206
        %p454 = pneg %p230
        %p455 = pneg %p227
        %p456 = pneg %p256
        %p457 = pneg %p253
        %s458 = sand.u32 %s243, 1
        %s459 = scalar_lea.sflag [#allocation4], %s458
        %s460 = sand.u32 %s243, 1
        %s461 = smul.addr %s460, 8
        %s462 = scalar_lea.vmem [#allocation13], %s461
        %v464 = vld [vmem:[%s388] sm:$0xff]
        %v465 = vpack.c.bf16 %v464, %v464
        %v466 = vld [vmem:[%s397] sm:$0xff]
        %v467 = vpack.c.bf16 %v466, %v466
        %v468 = vld [vmem:[%s406] sm:$0xff]
        %v469 = vpack.c.bf16 %v468, %v468
        %v470 = vld [vmem:[#allocation8] sm:$0xff]
        %v471 = vld [vmem:[#allocation8 + $0x8] sm:$0xf]
        %v472 = vld [vmem:[#allocation8 + $0xc] sm:$0xff]
        %v473 = vld [vmem:[#allocation8 + $0x14] sm:$0xf]
        %v474 = vld [vmem:[#allocation8 + $0x18] sm:$0xff]
        %v475 = vld [vmem:[#allocation8 + $0x20] sm:$0xf]
        %v476 = vld [vmem:[#allocation8 + $0x24] sm:$0xff]
        %v477 = vld [vmem:[#allocation8 + $0x2c] sm:$0xf]
        %v478 = vld [vmem:[#allocation8 + $0x30] sm:$0xff]
        %v479 = vld [vmem:[#allocation8 + $0x38] sm:$0xf]
        %v480 = vld [vmem:[#allocation8 + $0x3c] sm:$0xff]
        %v481 = vld [vmem:[#allocation8 + $0x44] sm:$0xf]
        %v482 = vld [vmem:[#allocation8 + $0x48] sm:$0xff]
        %v483 = vld [vmem:[#allocation8 + $0x50] sm:$0xf]
        %v484 = vld [vmem:[#allocation8 + $0x54] sm:$0xff]
        %v485 = vld [vmem:[#allocation8 + $0x5c] sm:$0xf]
        %v486 = vld [vmem:[#allocation8 + $0x60] sm:$0xff]
        %v487 = vld [vmem:[#allocation8 + $0x68] sm:$0xf]
        %v488 = vld [vmem:[#allocation8 + $0x6c] sm:$0xff]
        %v489 = vld [vmem:[#allocation8 + $0x74] sm:$0xf]
        %v490 = vld [vmem:[#allocation8 + $0x78] sm:$0xff]
        %v491 = vld [vmem:[#allocation8 + $0x80] sm:$0xf]
        %v492 = vld [vmem:[#allocation8 + $0x84] sm:$0xff]
        %v493 = vld [vmem:[#allocation8 + $0x8c] sm:$0xf]
        %v494 = vld [vmem:[#allocation8 + $0x90] sm:$0xff]
        %v495 = vld [vmem:[#allocation8 + $0x98] sm:$0xf]
        %v496 = vld [vmem:[#allocation8 + $0x9c] sm:$0xff]
        %v497 = vld [vmem:[#allocation8 + $0xa4] sm:$0xf]
        %v498 = vld [vmem:[#allocation8 + $0xa8] sm:$0xff]
        %v499 = vld [vmem:[#allocation8 + $0xb0] sm:$0xf]
        %v500 = vld [vmem:[#allocation8 + $0xb4] sm:$0xff]
        %v501 = vld [vmem:[#allocation8 + $0xbc] sm:$0xf]
        %v502 = vld [vmem:[#allocation8 + $0xc0] sm:$0xff]
        %v503 = vld [vmem:[#allocation8 + $0xc8] sm:$0xf]
        %v504 = vld [vmem:[#allocation8 + $0xcc] sm:$0xff]
        %v505 = vld [vmem:[#allocation8 + $0xd4] sm:$0xf]
        %v506 = vld [vmem:[#allocation8 + $0xd8] sm:$0xff]
        %v507 = vld [vmem:[#allocation8 + $0xe0] sm:$0xf]
        %v508 = vld [vmem:[#allocation8 + $0xe4] sm:$0xff]
        %v509 = vld [vmem:[#allocation8 + $0xec] sm:$0xf]
        %v510 = vld [vmem:[#allocation8 + $0xf0] sm:$0xff]
        %v511 = vld [vmem:[#allocation8 + $0xf8] sm:$0xf]
        %v512 = vld [vmem:[#allocation8 + $0xfc] sm:$0xff]
        %v513 = vld [vmem:[#allocation8 + $0x104] sm:$0xf]
        %v514 = vld [vmem:[#allocation8 + $0x108] sm:$0xff]
        %v515 = vld [vmem:[#allocation8 + $0x110] sm:$0xf]
        %v516 = vld [vmem:[#allocation8 + $0x114] sm:$0xff]
        %v517 = vld [vmem:[#allocation8 + $0x11c] sm:$0xf]
        %v518 = vld [vmem:[#allocation8 + $0x120] sm:$0xff]
        %v519 = vld [vmem:[#allocation8 + $0x128] sm:$0xf]
        %v520 = vld [vmem:[#allocation8 + $0x12c] sm:$0xff]
        %v521 = vld [vmem:[#allocation8 + $0x134] sm:$0xf]
        %v522 = vld [vmem:[#allocation8 + $0x138] sm:$0xff]
        %v523 = vld [vmem:[#allocation8 + $0x140] sm:$0xf]
        %v524 = vld [vmem:[#allocation8 + $0x144] sm:$0xff]
        %v525 = vld [vmem:[#allocation8 + $0x14c] sm:$0xf]
        %v526 = vld [vmem:[#allocation8 + $0x150] sm:$0xff]
        %v527 = vld [vmem:[#allocation8 + $0x158] sm:$0xf]
        %v528 = vld [vmem:[#allocation8 + $0x15c] sm:$0xff]
        %v529 = vld [vmem:[#allocation8 + $0x164] sm:$0xf]
        %v530 = vld [vmem:[#allocation8 + $0x168] sm:$0xff]
        %v531 = vld [vmem:[#allocation8 + $0x170] sm:$0xf]
        %v532 = vld [vmem:[#allocation8 + $0x174] sm:$0xff]
        %v533 = vld [vmem:[#allocation8 + $0x17c] sm:$0xf]
        %v534 = vld [vmem:[#allocation8 + $0x180] sm:$0xff]
        %v535 = vld [vmem:[#allocation8 + $0x188] sm:$0xf]
        %v536 = vld [vmem:[#allocation8 + $0x18c] sm:$0xff]
        %v537 = vld [vmem:[#allocation8 + $0x194] sm:$0xf]
        %v538 = vld [vmem:[#allocation8 + $0x198] sm:$0xff]
        %v539 = vld [vmem:[#allocation8 + $0x1a0] sm:$0xf]
        %v540 = vld [vmem:[#allocation8 + $0x1a4] sm:$0xff]
        %v541 = vld [vmem:[#allocation8 + $0x1ac] sm:$0xf]
        %v542 = vld [vmem:[#allocation8 + $0x1b0] sm:$0xff]
        %v543 = vld [vmem:[#allocation8 + $0x1b8] sm:$0xf]
        %v544 = vld [vmem:[#allocation8 + $0x1bc] sm:$0xff]
        %v545 = vld [vmem:[#allocation8 + $0x1c4] sm:$0xf]
        %v546 = vld [vmem:[#allocation8 + $0x1c8] sm:$0xff]
        %v547 = vld [vmem:[#allocation8 + $0x1d0] sm:$0xf]
        %v548 = vld [vmem:[#allocation8 + $0x1d4] sm:$0xff]
        %v549 = vld [vmem:[#allocation8 + $0x1dc] sm:$0xf]
        %v550 = vld [vmem:[#allocation8 + $0x1e0] sm:$0xff]
        %v551 = vld [vmem:[#allocation8 + $0x1e8] sm:$0xf]
        %v552 = vld [vmem:[#allocation8 + $0x1ec] sm:$0xff]
        %v553 = vld [vmem:[#allocation8 + $0x1f4] sm:$0xf]
        %v554 = vld [vmem:[#allocation8 + $0x1f8] sm:$0xff]
        %v555 = vld [vmem:[#allocation8 + $0x200] sm:$0xf]
        %v556 = vld [vmem:[#allocation8 + $0x204] sm:$0xff]
        %v557 = vld [vmem:[#allocation8 + $0x20c] sm:$0xf]
        %v558 = vld [vmem:[#allocation8 + $0x210] sm:$0xff]
        %v559 = vld [vmem:[#allocation8 + $0x218] sm:$0xf]
        %v560 = vld [vmem:[#allocation8 + $0x21c] sm:$0xff]
        %v561 = vld [vmem:[#allocation8 + $0x224] sm:$0xf]
        %v562 = vld [vmem:[#allocation8 + $0x228] sm:$0xff]
        %v563 = vld [vmem:[#allocation8 + $0x230] sm:$0xf]
        %v564 = vld [vmem:[#allocation8 + $0x234] sm:$0xff]
        %v565 = vld [vmem:[#allocation8 + $0x23c] sm:$0xf]
        %v566 = vld [vmem:[%s4] sm:$0x7]
        %v568 = vlaneseq
        %v569 = vshrl.u32 %v568, 7
        %v570 = vsub.s32 0, %v569
        %v571 = vrot.slane %v566, %v570
        %v572 = vlaneseq
        %v573 = vshrl.u32 %v572, 7
        %v574 = vsub.s32 1, %v573
        %v575 = vrot.slane %v566, %v574
        %v576 = vlaneseq
        %v577 = vshrl.u32 %v576, 7
        %v578 = vsub.s32 2, %v577
        %v579 = vrot.slane %v566, %v578
        %v679 = vunpack.c.l.b16 %v470
        %v680 = vunpack.c.h.b16 %v470
        %v681 = vunpack.c.l.b16 %v471
        %v682 = vunpack.c.l.b16 %v472
        %v683 = vunpack.c.h.b16 %v472
        %v684 = vunpack.c.l.b16 %v473
        %v685 = vunpack.c.l.b16 %v474
        %v686 = vunpack.c.h.b16 %v474
        %v687 = vunpack.c.l.b16 %v475
        %v688 = vunpack.c.l.b16 %v476
        %v689 = vunpack.c.h.b16 %v476
        %v690 = vunpack.c.l.b16 %v477
        %v691 = vunpack.c.l.b16 %v478
        %v692 = vunpack.c.h.b16 %v478
        %v693 = vunpack.c.l.b16 %v479
        %v694 = vunpack.c.l.b16 %v480
        %v695 = vunpack.c.h.b16 %v480
        %v696 = vunpack.c.l.b16 %v481
        %v697 = vunpack.c.l.b16 %v482
        %v698 = vunpack.c.h.b16 %v482
        %v699 = vunpack.c.l.b16 %v483
        %v700 = vunpack.c.l.b16 %v484
        %v701 = vunpack.c.h.b16 %v484
        %v702 = vunpack.c.l.b16 %v485
        %v703 = vunpack.c.l.b16 %v486
        %v704 = vunpack.c.h.b16 %v486
        %v705 = vunpack.c.l.b16 %v487
        %v706 = vunpack.c.l.b16 %v488
        %v707 = vunpack.c.h.b16 %v488
        %v708 = vunpack.c.l.b16 %v489
        %v709 = vunpack.c.l.b16 %v490
        %v710 = vunpack.c.h.b16 %v490
        %v711 = vunpack.c.l.b16 %v491
        %v712 = vunpack.c.l.b16 %v492
        %v713 = vunpack.c.h.b16 %v492
        %v714 = vunpack.c.l.b16 %v493
        %v715 = vunpack.c.l.b16 %v494
        %v716 = vunpack.c.h.b16 %v494
        %v717 = vunpack.c.l.b16 %v495
        %v718 = vunpack.c.l.b16 %v496
        %v719 = vunpack.c.h.b16 %v496
        %v720 = vunpack.c.l.b16 %v497
        %v721 = vunpack.c.l.b16 %v498
        %v722 = vunpack.c.h.b16 %v498
        %v723 = vunpack.c.l.b16 %v499
        %v724 = vunpack.c.l.b16 %v500
        %v725 = vunpack.c.h.b16 %v500
        %v726 = vunpack.c.l.b16 %v501
        %v727 = vunpack.c.l.b16 %v502
        %v728 = vunpack.c.h.b16 %v502
        %v729 = vunpack.c.l.b16 %v503
        %v730 = vunpack.c.l.b16 %v504
        %v731 = vunpack.c.h.b16 %v504
        %v732 = vunpack.c.l.b16 %v505
        %v733 = vunpack.c.l.b16 %v506
        %v734 = vunpack.c.h.b16 %v506
        %v735 = vunpack.c.l.b16 %v507
        %v736 = vunpack.c.l.b16 %v508
        %v737 = vunpack.c.h.b16 %v508
        %v738 = vunpack.c.l.b16 %v509
        %v739 = vunpack.c.l.b16 %v510
        %v740 = vunpack.c.h.b16 %v510
        %v741 = vunpack.c.l.b16 %v511
        %v742 = vunpack.c.l.b16 %v512
        %v743 = vunpack.c.h.b16 %v512
        %v744 = vunpack.c.l.b16 %v513
        %v745 = vunpack.c.l.b16 %v514
        %v746 = vunpack.c.h.b16 %v514
        %v747 = vunpack.c.l.b16 %v515
        %v748 = vunpack.c.l.b16 %v516
        %v749 = vunpack.c.h.b16 %v516
        %v750 = vunpack.c.l.b16 %v517
        %v751 = vunpack.c.l.b16 %v518
        %v752 = vunpack.c.h.b16 %v518
        %v753 = vunpack.c.l.b16 %v519
        %v754 = vunpack.c.l.b16 %v520
        %v755 = vunpack.c.h.b16 %v520
        %v756 = vunpack.c.l.b16 %v521
        %v757 = vunpack.c.l.b16 %v522
        %v758 = vunpack.c.h.b16 %v522
        %v759 = vunpack.c.l.b16 %v523
        %v760 = vunpack.c.l.b16 %v524
        %v761 = vunpack.c.h.b16 %v524
        %v762 = vunpack.c.l.b16 %v525
        %v763 = vunpack.c.l.b16 %v526
        %v764 = vunpack.c.h.b16 %v526
        %v765 = vunpack.c.l.b16 %v527
        %v766 = vunpack.c.l.b16 %v528
        %v767 = vunpack.c.h.b16 %v528
        %v768 = vunpack.c.l.b16 %v529
        %v769 = vunpack.c.l.b16 %v530
        %v770 = vunpack.c.h.b16 %v530
        %v771 = vunpack.c.l.b16 %v531
        %v772 = vunpack.c.l.b16 %v532
        %v773 = vunpack.c.h.b16 %v532
        %v774 = vunpack.c.l.b16 %v533
        %v775 = vunpack.c.l.b16 %v534
        %v776 = vunpack.c.h.b16 %v534
        %v777 = vunpack.c.l.b16 %v535
        %v778 = vunpack.c.l.b16 %v536
        %v779 = vunpack.c.h.b16 %v536
        %v780 = vunpack.c.l.b16 %v537
        %v781 = vunpack.c.l.b16 %v538
        %v782 = vunpack.c.h.b16 %v538
        %v783 = vunpack.c.l.b16 %v539
        %v784 = vunpack.c.l.b16 %v540
        %v785 = vunpack.c.h.b16 %v540
        %v786 = vunpack.c.l.b16 %v541
        %v787 = vunpack.c.l.b16 %v542
        %v788 = vunpack.c.h.b16 %v542
        %v789 = vunpack.c.l.b16 %v543
        %v790 = vunpack.c.l.b16 %v544
        %v791 = vunpack.c.h.b16 %v544
        %v792 = vunpack.c.l.b16 %v545
        %v793 = vunpack.c.l.b16 %v546
        %v794 = vunpack.c.h.b16 %v546
        %v795 = vunpack.c.l.b16 %v547
        %v796 = vunpack.c.l.b16 %v548
        %v797 = vunpack.c.h.b16 %v548
        %v798 = vunpack.c.l.b16 %v549
        %v799 = vunpack.c.l.b16 %v550
        %v800 = vunpack.c.h.b16 %v550
        %v801 = vunpack.c.l.b16 %v551
        %v802 = vunpack.c.l.b16 %v552
        %v803 = vunpack.c.h.b16 %v552
        %v804 = vunpack.c.l.b16 %v553
        %v805 = vunpack.c.l.b16 %v554
        %v806 = vunpack.c.h.b16 %v554
        %v807 = vunpack.c.l.b16 %v555
        %v808 = vunpack.c.l.b16 %v556
        %v809 = vunpack.c.h.b16 %v556
        %v810 = vunpack.c.l.b16 %v557
        %v811 = vunpack.c.l.b16 %v558
        %v812 = vunpack.c.h.b16 %v558
        %v813 = vunpack.c.l.b16 %v559
        %v814 = vunpack.c.l.b16 %v560
        %v815 = vunpack.c.h.b16 %v560
        %v816 = vunpack.c.l.b16 %v561
        %v817 = vunpack.c.l.b16 %v562
        %v818 = vunpack.c.h.b16 %v562
        %v819 = vunpack.c.l.b16 %v563
        %v820 = vunpack.c.l.b16 %v564
        %v821 = vunpack.c.h.b16 %v564
        %v822 = vunpack.c.l.b16 %v565
        %v823 = vpack.c.b16 %v682, %v679
        %v824 = vpack.c.b16 %v683, %v680
        %v825 = vpack.c.b16 %v684, %v681
        %v826 = vpack.c.b16 %v688, %v685
        %v827 = vpack.c.b16 %v689, %v686
        %v828 = vpack.c.b16 %v690, %v687
        %v829 = vpack.c.b16 %v694, %v691
        %v830 = vpack.c.b16 %v695, %v692
        %v831 = vpack.c.b16 %v696, %v693
        %v832 = vpack.c.b16 %v700, %v697
        %v833 = vpack.c.b16 %v701, %v698
        %v834 = vpack.c.b16 %v702, %v699
        %v835 = vpack.c.b16 %v706, %v703
        %v836 = vpack.c.b16 %v707, %v704
        %v837 = vpack.c.b16 %v708, %v705
        %v838 = vpack.c.b16 %v712, %v709
        %v839 = vpack.c.b16 %v713, %v710
        %v840 = vpack.c.b16 %v714, %v711
        %v841 = vpack.c.b16 %v718, %v715
        %v842 = vpack.c.b16 %v719, %v716
        %v843 = vpack.c.b16 %v720, %v717
        %v844 = vpack.c.b16 %v724, %v721
        %v845 = vpack.c.b16 %v725, %v722
        %v846 = vpack.c.b16 %v726, %v723
        %v847 = vpack.c.b16 %v730, %v727
        %v848 = vpack.c.b16 %v731, %v728
        %v849 = vpack.c.b16 %v732, %v729
        %v850 = vpack.c.b16 %v736, %v733
        %v851 = vpack.c.b16 %v737, %v734
        %v852 = vpack.c.b16 %v738, %v735
        %v853 = vpack.c.b16 %v742, %v739
        %v854 = vpack.c.b16 %v743, %v740
        %v855 = vpack.c.b16 %v744, %v741
        %v856 = vpack.c.b16 %v748, %v745
        %v857 = vpack.c.b16 %v749, %v746
        %v858 = vpack.c.b16 %v750, %v747
        %v859 = vpack.c.b16 %v754, %v751
        %v860 = vpack.c.b16 %v755, %v752
        %v861 = vpack.c.b16 %v756, %v753
        %v862 = vpack.c.b16 %v760, %v757
        %v863 = vpack.c.b16 %v761, %v758
        %v864 = vpack.c.b16 %v762, %v759
        %v865 = vpack.c.b16 %v766, %v763
        %v866 = vpack.c.b16 %v767, %v764
        %v867 = vpack.c.b16 %v768, %v765
        %v868 = vpack.c.b16 %v772, %v769
        %v869 = vpack.c.b16 %v773, %v770
        %v870 = vpack.c.b16 %v774, %v771
        %v871 = vpack.c.b16 %v778, %v775
        %v872 = vpack.c.b16 %v779, %v776
        %v873 = vpack.c.b16 %v780, %v777
        %v874 = vpack.c.b16 %v784, %v781
        %v875 = vpack.c.b16 %v785, %v782
        %v876 = vpack.c.b16 %v786, %v783
        %v877 = vpack.c.b16 %v790, %v787
        %v878 = vpack.c.b16 %v791, %v788
        %v879 = vpack.c.b16 %v792, %v789
        %v880 = vpack.c.b16 %v796, %v793
        %v881 = vpack.c.b16 %v797, %v794
        %v882 = vpack.c.b16 %v798, %v795
        %v883 = vpack.c.b16 %v802, %v799
        %v884 = vpack.c.b16 %v803, %v800
        %v885 = vpack.c.b16 %v804, %v801
        %v886 = vpack.c.b16 %v808, %v805
        %v887 = vpack.c.b16 %v809, %v806
        %v888 = vpack.c.b16 %v810, %v807
        %v889 = vpack.c.b16 %v814, %v811
        %v890 = vpack.c.b16 %v815, %v812
        %v891 = vpack.c.b16 %v816, %v813
        %v892 = vpack.c.b16 %v820, %v817
        %v893 = vpack.c.b16 %v821, %v818
        %v894 = vpack.c.b16 %v822, %v819
        %967 = vmatprep.subr.bf16.mxu0 %v824
        %968 = vmatpush1.bf16.msra.mxu0 %v823
        %969 = vmatprep.subr.bf16.mxu0 %v827
        %970 = vmatpush1.bf16.msra.mxu0 %v826
        %971 = vmatprep.subr.bf16.mxu0 %v830
        %972 = vmatpush1.bf16.msra.mxu0 %v829
        %973 = vmatprep.subr.bf16.mxu0 %v833
        %974 = vmatpush1.bf16.msra.mxu0 %v832
        %975 = vmatprep.subr.bf16.mxu0 %v836
        %976 = vmatpush1.bf16.msra.mxu0 %v835
        %977 = vmatprep.subr.bf16.mxu0 %v839
        %978 = vmatpush1.bf16.msra.mxu0 %v838
        %979 = vmatprep.subr.bf16.mxu0 %v842
        %980 = vmatpush1.bf16.msra.mxu0 %v841
        %981 = vmatprep.subr.bf16.mxu0 %v845
        %982 = vmatpush1.bf16.msra.mxu0 %v844
        %983 = vmatprep.subr.bf16.mxu0 %v848
        %984 = vmatpush1.bf16.msra.mxu0 %v847
        %985 = vmatprep.subr.bf16.mxu0 %v851
        %986 = vmatpush1.bf16.msra.mxu0 %v850
        %987 = vmatprep.subr.bf16.mxu0 %v854
        %988 = vmatpush1.bf16.msra.mxu0 %v853
        %989 = vmatprep.subr.bf16.mxu0 %v857
        %990 = vmatpush1.bf16.msra.mxu0 %v856
        %991 = vmatprep.subr.bf16.mxu0 %v860
        %992 = vmatpush1.bf16.msra.mxu0 %v859
        %993 = vmatprep.subr.bf16.mxu0 %v863
        %994 = vmatpush1.bf16.msra.mxu0 %v862
        %995 = vmatprep.subr.bf16.mxu0 %v866
        %996 = vmatpush1.bf16.msra.mxu0 %v865
        %997 = vmatprep.subr.bf16.mxu0 %v869
        %998 = vmatpush1.bf16.msra.mxu0 %v868
        %999 = vmatprep.mubr.bf16.mxu0 %v467
        %1000 = vmatmul.mubr.bf16.gmra.mrb[0].mxu0 %v465
        %v1001 = vpop.f32.mrb[0].mxu0
        %v1002 = vadd.f32 %v571, %v1001
        %v1003 = vpop.f32.mrb[0].mxu0
        %v1004 = vadd.f32 %v575, %v1003
        %v1005 = vpop.f32.mrb[0].mxu0
        %v1006 = vpop.f32.mrb[0].mxu0
        %1007 = vdwg.mxu0
        %1008 = vmatprep.subr.bf16.mxu0 %v872
        %1009 = vmatpush1.bf16.msra.mxu0 %v871
        %1010 = vmatprep.subr.bf16.mxu0 %v875
        %1011 = vmatpush1.bf16.msra.mxu0 %v874
        %1012 = vmatprep.subr.bf16.mxu0 %v878
        %1013 = vmatpush1.bf16.msra.mxu0 %v877
        %1014 = vmatprep.subr.bf16.mxu0 %v881
        %1015 = vmatpush1.bf16.msra.mxu0 %v880
        %1016 = vmatprep.subr.bf16.mxu0 %v884
        %1017 = vmatpush1.bf16.msra.mxu0 %v883
        %1018 = vmatprep.subr.bf16.mxu0 %v887
        %1019 = vmatpush1.bf16.msra.mxu0 %v886
        %1020 = vmatprep.subr.bf16.mxu0 %v890
        %1021 = vmatpush1.bf16.msra.mxu0 %v889
        %1022 = vmatprep.subr.bf16.mxu0 %v893
        %1023 = vmatpush1.bf16.msra.mxu0 %v892
        %1024 = vmatprep.subr.bf16.mxu0 0
        %1025 = vmatpush1.bf16.msra.mxu0 0
        %1026 = vmatprep.subr.bf16.mxu0 0
        %1027 = vmatpush1.bf16.msra.mxu0 0
        %1028 = vmatprep.subr.bf16.mxu0 0
        %1029 = vmatpush1.bf16.msra.mxu0 0
        %1030 = vmatprep.subr.bf16.mxu0 0
        %1031 = vmatpush1.bf16.msra.mxu0 0
        %1032 = vmatprep.subr.bf16.mxu0 0
        %1033 = vmatpush1.bf16.msra.mxu0 0
        %1034 = vmatprep.subr.bf16.mxu0 0
        %1035 = vmatpush1.bf16.msra.mxu0 0
        %1036 = vmatprep.subr.bf16.mxu0 0
        %1037 = vmatpush1.bf16.msra.mxu0 0
        %1038 = vmatprep.subr.bf16.mxu0 0
        %1039 = vmatpush1.bf16.msra.mxu0 0
        %1040 = vmatprep.mubr.bf16.mxu0 0
        %1041 = vmatmul.mubr.bf16.gmra.mrb[0].mxu0 %v469
        %v1042 = vpop.f32.mrb[0].mxu0
        %v1043 = vadd.f32 %v1002, %v1042
        %v1044 = vpop.f32.mrb[0].mxu0
        %v1045 = vadd.f32 %v1004, %v1044
        %v1046 = vpop.f32.mrb[0].mxu0
        %v1047 = vpop.f32.mrb[0].mxu0
        %1048 = vdwg.mxu0
        %1049 = vmatprep.subr.bf16.mxu0 0
        %1050 = vmatpush1.bf16.msra.mxu0 %v825
        %1051 = vmatprep.subr.bf16.mxu0 0
        %1052 = vmatpush1.bf16.msra.mxu0 %v828
        %1053 = vmatprep.subr.bf16.mxu0 0
        %1054 = vmatpush1.bf16.msra.mxu0 %v831
        %1055 = vmatprep.subr.bf16.mxu0 0
        %1056 = vmatpush1.bf16.msra.mxu0 %v834
        %1057 = vmatprep.subr.bf16.mxu0 0
        %1058 = vmatpush1.bf16.msra.mxu0 %v837
        %1059 = vmatprep.subr.bf16.mxu0 0
        %1060 = vmatpush1.bf16.msra.mxu0 %v840
        %1061 = vmatprep.subr.bf16.mxu0 0
        %1062 = vmatpush1.bf16.msra.mxu0 %v843
        %1063 = vmatprep.subr.bf16.mxu0 0
        %1064 = vmatpush1.bf16.msra.mxu0 %v846
        %1065 = vmatprep.subr.bf16.mxu0 0
        %1066 = vmatpush1.bf16.msra.mxu0 %v849
        %1067 = vmatprep.subr.bf16.mxu0 0
        %1068 = vmatpush1.bf16.msra.mxu0 %v852
        %1069 = vmatprep.subr.bf16.mxu0 0
        %1070 = vmatpush1.bf16.msra.mxu0 %v855
        %1071 = vmatprep.subr.bf16.mxu0 0
        %1072 = vmatpush1.bf16.msra.mxu0 %v858
        %1073 = vmatprep.subr.bf16.mxu0 0
        %1074 = vmatpush1.bf16.msra.mxu0 %v861
        %1075 = vmatprep.subr.bf16.mxu0 0
        %1076 = vmatpush1.bf16.msra.mxu0 %v864
        %1077 = vmatprep.subr.bf16.mxu0 0
        %1078 = vmatpush1.bf16.msra.mxu0 %v867
        %1079 = vmatprep.subr.bf16.mxu0 0
        %1080 = vmatpush1.bf16.msra.mxu0 %v870
        %1081 = vmatprep.mubr.bf16.mxu0 %v467
        %1082 = vmatmul.mubr.bf16.gmra.mrb[0].mxu0 %v465
        %v1083 = vpop.f32.mrb[0].mxu0
        %v1084 = vadd.f32 %v579, %v1083
        %v1085 = vpop.f32.mrb[0].mxu0
        %v1086 = vpop.f32.mrb[0].mxu0
        %v1087 = vpop.f32.mrb[0].mxu0
        %1088 = vdwg.mxu0
        %1089 = vmatprep.subr.bf16.mxu0 0
        %1090 = vmatpush1.bf16.msra.mxu0 %v873
        %1091 = vmatprep.subr.bf16.mxu0 0
        %1092 = vmatpush1.bf16.msra.mxu0 %v876
        %1093 = vmatprep.subr.bf16.mxu0 0
        %1094 = vmatpush1.bf16.msra.mxu0 %v879
        %1095 = vmatprep.subr.bf16.mxu0 0
        %1096 = vmatpush1.bf16.msra.mxu0 %v882
        %1097 = vmatprep.subr.bf16.mxu0 0
        %1098 = vmatpush1.bf16.msra.mxu0 %v885
        %1099 = vmatprep.subr.bf16.mxu0 0
        %1100 = vmatpush1.bf16.msra.mxu0 %v888
        %1101 = vmatprep.subr.bf16.mxu0 0
        %1102 = vmatpush1.bf16.msra.mxu0 %v891
        %1103 = vmatprep.subr.bf16.mxu0 0
        %1104 = vmatpush1.bf16.msra.mxu0 %v894
        %1105 = vmatprep.subr.bf16.mxu0 0
        %1106 = vmatpush1.bf16.msra.mxu0 0
        %1107 = vmatprep.subr.bf16.mxu0 0
        %1108 = vmatpush1.bf16.msra.mxu0 0
        %1109 = vmatprep.subr.bf16.mxu0 0
        %1110 = vmatpush1.bf16.msra.mxu0 0
        %1111 = vmatprep.subr.bf16.mxu0 0
        %1112 = vmatpush1.bf16.msra.mxu0 0
        %1113 = vmatprep.subr.bf16.mxu0 0
        %1114 = vmatpush1.bf16.msra.mxu0 0
        %1115 = vmatprep.subr.bf16.mxu0 0
        %1116 = vmatpush1.bf16.msra.mxu0 0
        %1117 = vmatprep.subr.bf16.mxu0 0
        %1118 = vmatpush1.bf16.msra.mxu0 0
        %1119 = vmatprep.subr.bf16.mxu0 0
        %1120 = vmatpush1.bf16.msra.mxu0 0
        %1121 = vmatprep.mubr.bf16.mxu0 0
        %1122 = vmatmul.mubr.bf16.gmra.mrb[0].mxu0 %v469
        %v1123 = vpop.f32.mrb[0].mxu0
        %v1124 = vadd.f32 %v1084, %v1123
        %v1125 = vpop.f32.mrb[0].mxu0
        %v1126 = vpop.f32.mrb[0].mxu0
        %v1127 = vpop.f32.mrb[0].mxu0
        %1128 = vdwg.mxu0
        %v1129 = vmax.f32 %v1043, 0.0
        %v1130 = vmax.f32 %v1045, 0.0
        %v1131 = vmax.f32 %v1124, 0.0
        %v1132 = vpack.c.bf16 %v1129, %v1129
        %v1133 = vpack.c.bf16 %v1130, %v1130
        %v1134 = vpack.c.bf16 %v1131, %v1131
        %v1135 = vld [vmem:[#allocation10] sm:$0xff]
        %v1136 = vld [vmem:[#allocation10 + $0x8] sm:$0xf]
        %v1137 = vld [vmem:[#allocation10 + $0xc] sm:$0xff]
        %v1138 = vld [vmem:[#allocation10 + $0x14] sm:$0xf]
        %v1139 = vld [vmem:[#allocation10 + $0x18] sm:$0xff]
        %v1140 = vld [vmem:[#allocation10 + $0x20] sm:$0xf]
        %v1141 = vld [vmem:[#allocation10 + $0x24] sm:$0xff]
        %v1142 = vld [vmem:[#allocation10 + $0x2c] sm:$0xf]
        %v1143 = vld [vmem:[#allocation10 + $0x30] sm:$0xff]
        %v1144 = vld [vmem:[#allocation10 + $0x38] sm:$0xf]
        %v1145 = vld [vmem:[#allocation10 + $0x3c] sm:$0xff]
        %v1146 = vld [vmem:[#allocation10 + $0x44] sm:$0xf]
        %v1147 = vld [vmem:[#allocation10 + $0x48] sm:$0xff]
        %v1148 = vld [vmem:[#allocation10 + $0x50] sm:$0xf]
        %v1149 = vld [vmem:[#allocation10 + $0x54] sm:$0xff]
        %v1150 = vld [vmem:[#allocation10 + $0x5c] sm:$0xf]
        %v1151 = vld [vmem:[#allocation10 + $0x60] sm:$0xff]
        %v1152 = vld [vmem:[#allocation10 + $0x68] sm:$0xf]
        %v1153 = vld [vmem:[#allocation10 + $0x6c] sm:$0xff]
        %v1154 = vld [vmem:[#allocation10 + $0x74] sm:$0xf]
        %v1155 = vld [vmem:[#allocation10 + $0x78] sm:$0xff]
        %v1156 = vld [vmem:[#allocation10 + $0x80] sm:$0xf]
        %v1157 = vld [vmem:[#allocation10 + $0x84] sm:$0xff]
        %v1158 = vld [vmem:[#allocation10 + $0x8c] sm:$0xf]
        %v1159 = vld [vmem:[#allocation10 + $0x90] sm:$0xff]
        %v1160 = vld [vmem:[#allocation10 + $0x98] sm:$0xf]
        %v1161 = vld [vmem:[#allocation10 + $0x9c] sm:$0xff]
        %v1162 = vld [vmem:[#allocation10 + $0xa4] sm:$0xf]
        %v1163 = vld [vmem:[#allocation10 + $0xa8] sm:$0xff]
        %v1164 = vld [vmem:[#allocation10 + $0xb0] sm:$0xf]
        %v1165 = vld [vmem:[#allocation10 + $0xb4] sm:$0xff]
        %v1166 = vld [vmem:[#allocation10 + $0xbc] sm:$0xf]
        %v1167 = vld [vmem:[#allocation10 + $0xc0] sm:$0xff]
        %v1168 = vld [vmem:[#allocation10 + $0xc8] sm:$0xf]
        %v1169 = vld [vmem:[#allocation10 + $0xcc] sm:$0xff]
        %v1170 = vld [vmem:[#allocation10 + $0xd4] sm:$0xf]
        %v1171 = vld [vmem:[#allocation10 + $0xd8] sm:$0xff]
        %v1172 = vld [vmem:[#allocation10 + $0xe0] sm:$0xf]
        %v1173 = vld [vmem:[#allocation10 + $0xe4] sm:$0xff]
        %v1174 = vld [vmem:[#allocation10 + $0xec] sm:$0xf]
        %v1175 = vld [vmem:[#allocation10 + $0xf0] sm:$0xff]
        %v1176 = vld [vmem:[#allocation10 + $0xf8] sm:$0xf]
        %v1177 = vld [vmem:[#allocation10 + $0xfc] sm:$0xff]
        %v1178 = vld [vmem:[#allocation10 + $0x104] sm:$0xf]
        %v1179 = vld [vmem:[#allocation10 + $0x108] sm:$0xff]
        %v1180 = vld [vmem:[#allocation10 + $0x110] sm:$0xf]
        %v1181 = vld [vmem:[#allocation10 + $0x114] sm:$0xff]
        %v1182 = vld [vmem:[#allocation10 + $0x11c] sm:$0xf]
        %v1183 = vld [vmem:[#allocation10 + $0x120] sm:$0xff]
        %v1184 = vld [vmem:[#allocation10 + $0x128] sm:$0xf]
        %v1185 = vld [vmem:[#allocation10 + $0x12c] sm:$0xff]
        %v1186 = vld [vmem:[#allocation10 + $0x134] sm:$0xf]
        %v1187 = vld [vmem:[#allocation10 + $0x138] sm:$0xff]
        %v1188 = vld [vmem:[#allocation10 + $0x140] sm:$0xf]
        %v1189 = vld [vmem:[#allocation10 + $0x144] sm:$0xff]
        %v1190 = vld [vmem:[#allocation10 + $0x14c] sm:$0xf]
        %v1191 = vld [vmem:[#allocation10 + $0x150] sm:$0xff]
        %v1192 = vld [vmem:[#allocation10 + $0x158] sm:$0xf]
        %v1193 = vld [vmem:[#allocation10 + $0x15c] sm:$0xff]
        %v1194 = vld [vmem:[#allocation10 + $0x164] sm:$0xf]
        %v1195 = vld [vmem:[#allocation10 + $0x168] sm:$0xff]
        %v1196 = vld [vmem:[#allocation10 + $0x170] sm:$0xf]
        %v1197 = vld [vmem:[#allocation10 + $0x174] sm:$0xff]
        %v1198 = vld [vmem:[#allocation10 + $0x17c] sm:$0xf]
        %v1199 = vld [vmem:[#allocation10 + $0x180] sm:$0xff]
        %v1200 = vld [vmem:[#allocation10 + $0x188] sm:$0xf]
        %v1201 = vld [vmem:[#allocation10 + $0x18c] sm:$0xff]
        %v1202 = vld [vmem:[#allocation10 + $0x194] sm:$0xf]
        %v1203 = vld [vmem:[#allocation10 + $0x198] sm:$0xff]
        %v1204 = vld [vmem:[#allocation10 + $0x1a0] sm:$0xf]
        %v1205 = vld [vmem:[#allocation10 + $0x1a4] sm:$0xff]
        %v1206 = vld [vmem:[#allocation10 + $0x1ac] sm:$0xf]
        %v1207 = vld [vmem:[#allocation10 + $0x1b0] sm:$0xff]
        %v1208 = vld [vmem:[#allocation10 + $0x1b8] sm:$0xf]
        %v1209 = vld [vmem:[#allocation10 + $0x1bc] sm:$0xff]
        %v1210 = vld [vmem:[#allocation10 + $0x1c4] sm:$0xf]
        %v1211 = vld [vmem:[#allocation10 + $0x1c8] sm:$0xff]
        %v1212 = vld [vmem:[#allocation10 + $0x1d0] sm:$0xf]
        %v1213 = vld [vmem:[#allocation10 + $0x1d4] sm:$0xff]
        %v1214 = vld [vmem:[#allocation10 + $0x1dc] sm:$0xf]
        %v1215 = vld [vmem:[#allocation10 + $0x1e0] sm:$0xff]
        %v1216 = vld [vmem:[#allocation10 + $0x1e8] sm:$0xf]
        %v1217 = vld [vmem:[#allocation10 + $0x1ec] sm:$0xff]
        %v1218 = vld [vmem:[#allocation10 + $0x1f4] sm:$0xf]
        %v1219 = vld [vmem:[#allocation10 + $0x1f8] sm:$0xff]
        %v1220 = vld [vmem:[#allocation10 + $0x200] sm:$0xf]
        %v1221 = vld [vmem:[#allocation10 + $0x204] sm:$0xff]
        %v1222 = vld [vmem:[#allocation10 + $0x20c] sm:$0xf]
        %v1223 = vld [vmem:[#allocation10 + $0x210] sm:$0xff]
        %v1224 = vld [vmem:[#allocation10 + $0x218] sm:$0xf]
        %v1225 = vld [vmem:[#allocation10 + $0x21c] sm:$0xff]
        %v1226 = vld [vmem:[#allocation10 + $0x224] sm:$0xf]
        %v1227 = vld [vmem:[#allocation10 + $0x228] sm:$0xff]
        %v1228 = vld [vmem:[#allocation10 + $0x230] sm:$0xf]
        %v1229 = vld [vmem:[#allocation10 + $0x234] sm:$0xff]
        %v1230 = vld [vmem:[#allocation10 + $0x23c] sm:$0xf]
        %v1231 = vld [vmem:[%s6] sm:$0x7]
        %v1233 = vlaneseq
        %v1234 = vshrl.u32 %v1233, 7
        %v1235 = vsub.s32 0, %v1234
        %v1236 = vrot.slane %v1231, %v1235
        %v1237 = vlaneseq
        %v1238 = vshrl.u32 %v1237, 7
        %v1239 = vsub.s32 1, %v1238
        %v1240 = vrot.slane %v1231, %v1239
        %v1241 = vlaneseq
        %v1242 = vshrl.u32 %v1241, 7
        %v1243 = vsub.s32 2, %v1242
        %v1244 = vrot.slane %v1231, %v1243
        %v1344 = vunpack.c.l.b16 %v1135
        %v1345 = vunpack.c.h.b16 %v1135
        %v1346 = vunpack.c.l.b16 %v1136
        %v1347 = vunpack.c.l.b16 %v1137
        %v1348 = vunpack.c.h.b16 %v1137
        %v1349 = vunpack.c.l.b16 %v1138
        %v1350 = vunpack.c.l.b16 %v1139
        %v1351 = vunpack.c.h.b16 %v1139
        %v1352 = vunpack.c.l.b16 %v1140
        %v1353 = vunpack.c.l.b16 %v1141
        %v1354 = vunpack.c.h.b16 %v1141
        %v1355 = vunpack.c.l.b16 %v1142
        %v1356 = vunpack.c.l.b16 %v1143
        %v1357 = vunpack.c.h.b16 %v1143
        %v1358 = vunpack.c.l.b16 %v1144
        %v1359 = vunpack.c.l.b16 %v1145
        %v1360 = vunpack.c.h.b16 %v1145
        %v1361 = vunpack.c.l.b16 %v1146
        %v1362 = vunpack.c.l.b16 %v1147
        %v1363 = vunpack.c.h.b16 %v1147
        %v1364 = vunpack.c.l.b16 %v1148
        %v1365 = vunpack.c.l.b16 %v1149
        %v1366 = vunpack.c.h.b16 %v1149
        %v1367 = vunpack.c.l.b16 %v1150
        %v1368 = vunpack.c.l.b16 %v1151
        %v1369 = vunpack.c.h.b16 %v1151
        %v1370 = vunpack.c.l.b16 %v1152
        %v1371 = vunpack.c.l.b16 %v1153
        %v1372 = vunpack.c.h.b16 %v1153
        %v1373 = vunpack.c.l.b16 %v1154
        %v1374 = vunpack.c.l.b16 %v1155
        %v1375 = vunpack.c.h.b16 %v1155
        %v1376 = vunpack.c.l.b16 %v1156
        %v1377 = vunpack.c.l.b16 %v1157
        %v1378 = vunpack.c.h.b16 %v1157
        %v1379 = vunpack.c.l.b16 %v1158
        %v1380 = vunpack.c.l.b16 %v1159
        %v1381 = vunpack.c.h.b16 %v1159
        %v1382 = vunpack.c.l.b16 %v1160
        %v1383 = vunpack.c.l.b16 %v1161
        %v1384 = vunpack.c.h.b16 %v1161
        %v1385 = vunpack.c.l.b16 %v1162
        %v1386 = vunpack.c.l.b16 %v1163
        %v1387 = vunpack.c.h.b16 %v1163
        %v1388 = vunpack.c.l.b16 %v1164
        %v1389 = vunpack.c.l.b16 %v1165
        %v1390 = vunpack.c.h.b16 %v1165
        %v1391 = vunpack.c.l.b16 %v1166
        %v1392 = vunpack.c.l.b16 %v1167
        %v1393 = vunpack.c.h.b16 %v1167
        %v1394 = vunpack.c.l.b16 %v1168
        %v1395 = vunpack.c.l.b16 %v1169
        %v1396 = vunpack.c.h.b16 %v1169
        %v1397 = vunpack.c.l.b16 %v1170
        %v1398 = vunpack.c.l.b16 %v1171
        %v1399 = vunpack.c.h.b16 %v1171
        %v1400 = vunpack.c.l.b16 %v1172
        %v1401 = vunpack.c.l.b16 %v1173
        %v1402 = vunpack.c.h.b16 %v1173
        %v1403 = vunpack.c.l.b16 %v1174
        %v1404 = vunpack.c.l.b16 %v1175
        %v1405 = vunpack.c.h.b16 %v1175
        %v1406 = vunpack.c.l.b16 %v1176
        %v1407 = vunpack.c.l.b16 %v1177
        %v1408 = vunpack.c.h.b16 %v1177
        %v1409 = vunpack.c.l.b16 %v1178
        %v1410 = vunpack.c.l.b16 %v1179
        %v1411 = vunpack.c.h.b16 %v1179
        %v1412 = vunpack.c.l.b16 %v1180
        %v1413 = vunpack.c.l.b16 %v1181
        %v1414 = vunpack.c.h.b16 %v1181
        %v1415 = vunpack.c.l.b16 %v1182
        %v1416 = vunpack.c.l.b16 %v1183
        %v1417 = vunpack.c.h.b16 %v1183
        %v1418 = vunpack.c.l.b16 %v1184
        %v1419 = vunpack.c.l.b16 %v1185
        %v1420 = vunpack.c.h.b16 %v1185
        %v1421 = vunpack.c.l.b16 %v1186
        %v1422 = vunpack.c.l.b16 %v1187
        %v1423 = vunpack.c.h.b16 %v1187
        %v1424 = vunpack.c.l.b16 %v1188
        %v1425 = vunpack.c.l.b16 %v1189
        %v1426 = vunpack.c.h.b16 %v1189
        %v1427 = vunpack.c.l.b16 %v1190
        %v1428 = vunpack.c.l.b16 %v1191
        %v1429 = vunpack.c.h.b16 %v1191
        %v1430 = vunpack.c.l.b16 %v1192
        %v1431 = vunpack.c.l.b16 %v1193
        %v1432 = vunpack.c.h.b16 %v1193
        %v1433 = vunpack.c.l.b16 %v1194
        %v1434 = vunpack.c.l.b16 %v1195
        %v1435 = vunpack.c.h.b16 %v1195
        %v1436 = vunpack.c.l.b16 %v1196
        %v1437 = vunpack.c.l.b16 %v1197
        %v1438 = vunpack.c.h.b16 %v1197
        %v1439 = vunpack.c.l.b16 %v1198
        %v1440 = vunpack.c.l.b16 %v1199
        %v1441 = vunpack.c.h.b16 %v1199
        %v1442 = vunpack.c.l.b16 %v1200
        %v1443 = vunpack.c.l.b16 %v1201
        %v1444 = vunpack.c.h.b16 %v1201
        %v1445 = vunpack.c.l.b16 %v1202
        %v1446 = vunpack.c.l.b16 %v1203
        %v1447 = vunpack.c.h.b16 %v1203
        %v1448 = vunpack.c.l.b16 %v1204
        %v1449 = vunpack.c.l.b16 %v1205
        %v1450 = vunpack.c.h.b16 %v1205
        %v1451 = vunpack.c.l.b16 %v1206
        %v1452 = vunpack.c.l.b16 %v1207
        %v1453 = vunpack.c.h.b16 %v1207
        %v1454 = vunpack.c.l.b16 %v1208
        %v1455 = vunpack.c.l.b16 %v1209
        %v1456 = vunpack.c.h.b16 %v1209
        %v1457 = vunpack.c.l.b16 %v1210
        %v1458 = vunpack.c.l.b16 %v1211
        %v1459 = vunpack.c.h.b16 %v1211
        %v1460 = vunpack.c.l.b16 %v1212
        %v1461 = vunpack.c.l.b16 %v1213
        %v1462 = vunpack.c.h.b16 %v1213
        %v1463 = vunpack.c.l.b16 %v1214
        %v1464 = vunpack.c.l.b16 %v1215
        %v1465 = vunpack.c.h.b16 %v1215
        %v1466 = vunpack.c.l.b16 %v1216
        %v1467 = vunpack.c.l.b16 %v1217
        %v1468 = vunpack.c.h.b16 %v1217
        %v1469 = vunpack.c.l.b16 %v1218
        %v1470 = vunpack.c.l.b16 %v1219
        %v1471 = vunpack.c.h.b16 %v1219
        %v1472 = vunpack.c.l.b16 %v1220
        %v1473 = vunpack.c.l.b16 %v1221
        %v1474 = vunpack.c.h.b16 %v1221
        %v1475 = vunpack.c.l.b16 %v1222
        %v1476 = vunpack.c.l.b16 %v1223
        %v1477 = vunpack.c.h.b16 %v1223
        %v1478 = vunpack.c.l.b16 %v1224
        %v1479 = vunpack.c.l.b16 %v1225
        %v1480 = vunpack.c.h.b16 %v1225
        %v1481 = vunpack.c.l.b16 %v1226
        %v1482 = vunpack.c.l.b16 %v1227
        %v1483 = vunpack.c.h.b16 %v1227
        %v1484 = vunpack.c.l.b16 %v1228
        %v1485 = vunpack.c.l.b16 %v1229
        %v1486 = vunpack.c.h.b16 %v1229
        %v1487 = vunpack.c.l.b16 %v1230
        %v1488 = vpack.c.b16 %v1347, %v1344
        %v1489 = vpack.c.b16 %v1348, %v1345
        %v1490 = vpack.c.b16 %v1349, %v1346
        %v1491 = vpack.c.b16 %v1353, %v1350
        %v1492 = vpack.c.b16 %v1354, %v1351
        %v1493 = vpack.c.b16 %v1355, %v1352
        %v1494 = vpack.c.b16 %v1359, %v1356
        %v1495 = vpack.c.b16 %v1360, %v1357
        %v1496 = vpack.c.b16 %v1361, %v1358
        %v1497 = vpack.c.b16 %v1365, %v1362
        %v1498 = vpack.c.b16 %v1366, %v1363
        %v1499 = vpack.c.b16 %v1367, %v1364
        %v1500 = vpack.c.b16 %v1371, %v1368
        %v1501 = vpack.c.b16 %v1372, %v1369
        %v1502 = vpack.c.b16 %v1373, %v1370
        %v1503 = vpack.c.b16 %v1377, %v1374
        %v1504 = vpack.c.b16 %v1378, %v1375
        %v1505 = vpack.c.b16 %v1379, %v1376
        %v1506 = vpack.c.b16 %v1383, %v1380
        %v1507 = vpack.c.b16 %v1384, %v1381
        %v1508 = vpack.c.b16 %v1385, %v1382
        %v1509 = vpack.c.b16 %v1389, %v1386
        %v1510 = vpack.c.b16 %v1390, %v1387
        %v1511 = vpack.c.b16 %v1391, %v1388
        %v1512 = vpack.c.b16 %v1395, %v1392
        %v1513 = vpack.c.b16 %v1396, %v1393
        %v1514 = vpack.c.b16 %v1397, %v1394
        %v1515 = vpack.c.b16 %v1401, %v1398
        %v1516 = vpack.c.b16 %v1402, %v1399
        %v1517 = vpack.c.b16 %v1403, %v1400
        %v1518 = vpack.c.b16 %v1407, %v1404
        %v1519 = vpack.c.b16 %v1408, %v1405
        %v1520 = vpack.c.b16 %v1409, %v1406
        %v1521 = vpack.c.b16 %v1413, %v1410
        %v1522 = vpack.c.b16 %v1414, %v1411
        %v1523 = vpack.c.b16 %v1415, %v1412
        %v1524 = vpack.c.b16 %v1419, %v1416
        %v1525 = vpack.c.b16 %v1420, %v1417
        %v1526 = vpack.c.b16 %v1421, %v1418
        %v1527 = vpack.c.b16 %v1425, %v1422
        %v1528 = vpack.c.b16 %v1426, %v1423
        %v1529 = vpack.c.b16 %v1427, %v1424
        %v1530 = vpack.c.b16 %v1431, %v1428
        %v1531 = vpack.c.b16 %v1432, %v1429
        %v1532 = vpack.c.b16 %v1433, %v1430
        %v1533 = vpack.c.b16 %v1437, %v1434
        %v1534 = vpack.c.b16 %v1438, %v1435
        %v1535 = vpack.c.b16 %v1439, %v1436
        %v1536 = vpack.c.b16 %v1443, %v1440
        %v1537 = vpack.c.b16 %v1444, %v1441
        %v1538 = vpack.c.b16 %v1445, %v1442
        %v1539 = vpack.c.b16 %v1449, %v1446
        %v1540 = vpack.c.b16 %v1450, %v1447
        %v1541 = vpack.c.b16 %v1451, %v1448
        %v1542 = vpack.c.b16 %v1455, %v1452
        %v1543 = vpack.c.b16 %v1456, %v1453
        %v1544 = vpack.c.b16 %v1457, %v1454
        %v1545 = vpack.c.b16 %v1461, %v1458
        %v1546 = vpack.c.b16 %v1462, %v1459
        %v1547 = vpack.c.b16 %v1463, %v1460
        %v1548 = vpack.c.b16 %v1467, %v1464
        %v1549 = vpack.c.b16 %v1468, %v1465
        %v1550 = vpack.c.b16 %v1469, %v1466
        %v1551 = vpack.c.b16 %v1473, %v1470
        %v1552 = vpack.c.b16 %v1474, %v1471
        %v1553 = vpack.c.b16 %v1475, %v1472
        %v1554 = vpack.c.b16 %v1479, %v1476
        %v1555 = vpack.c.b16 %v1480, %v1477
        %v1556 = vpack.c.b16 %v1481, %v1478
        %v1557 = vpack.c.b16 %v1485, %v1482
        %v1558 = vpack.c.b16 %v1486, %v1483
        %v1559 = vpack.c.b16 %v1487, %v1484
        %1632 = vmatprep.subr.bf16.mxu0 %v1489
        %1633 = vmatpush1.bf16.msra.mxu0 %v1488
        %1634 = vmatprep.subr.bf16.mxu0 %v1492
        %1635 = vmatpush1.bf16.msra.mxu0 %v1491
        %1636 = vmatprep.subr.bf16.mxu0 %v1495
        %1637 = vmatpush1.bf16.msra.mxu0 %v1494
        %1638 = vmatprep.subr.bf16.mxu0 %v1498
        %1639 = vmatpush1.bf16.msra.mxu0 %v1497
        %1640 = vmatprep.subr.bf16.mxu0 %v1501
        %1641 = vmatpush1.bf16.msra.mxu0 %v1500
        %1642 = vmatprep.subr.bf16.mxu0 %v1504
        %1643 = vmatpush1.bf16.msra.mxu0 %v1503
        %1644 = vmatprep.subr.bf16.mxu0 %v1507
        %1645 = vmatpush1.bf16.msra.mxu0 %v1506
        %1646 = vmatprep.subr.bf16.mxu0 %v1510
        %1647 = vmatpush1.bf16.msra.mxu0 %v1509
        %1648 = vmatprep.subr.bf16.mxu0 %v1513
        %1649 = vmatpush1.bf16.msra.mxu0 %v1512
        %1650 = vmatprep.subr.bf16.mxu0 %v1516
        %1651 = vmatpush1.bf16.msra.mxu0 %v1515
        %1652 = vmatprep.subr.bf16.mxu0 %v1519
        %1653 = vmatpush1.bf16.msra.mxu0 %v1518
        %1654 = vmatprep.subr.bf16.mxu0 %v1522
        %1655 = vmatpush1.bf16.msra.mxu0 %v1521
        %1656 = vmatprep.subr.bf16.mxu0 %v1525
        %1657 = vmatpush1.bf16.msra.mxu0 %v1524
        %1658 = vmatprep.subr.bf16.mxu0 %v1528
        %1659 = vmatpush1.bf16.msra.mxu0 %v1527
        %1660 = vmatprep.subr.bf16.mxu0 %v1531
        %1661 = vmatpush1.bf16.msra.mxu0 %v1530
        %1662 = vmatprep.subr.bf16.mxu0 %v1534
        %1663 = vmatpush1.bf16.msra.mxu0 %v1533
        %1664 = vmatprep.mubr.bf16.mxu0 %v1133
        %1665 = vmatmul.mubr.bf16.gmra.mrb[0].mxu0 %v1132
        %v1666 = vpop.f32.mrb[0].mxu0
        %v1667 = vadd.f32 %v1236, %v1666
        %v1668 = vpop.f32.mrb[0].mxu0
        %v1669 = vadd.f32 %v1240, %v1668
        %v1670 = vpop.f32.mrb[0].mxu0
        %v1671 = vpop.f32.mrb[0].mxu0
        %1672 = vdwg.mxu0
        %1673 = vmatprep.subr.bf16.mxu0 %v1537
        %1674 = vmatpush1.bf16.msra.mxu0 %v1536
        %1675 = vmatprep.subr.bf16.mxu0 %v1540
        %1676 = vmatpush1.bf16.msra.mxu0 %v1539
        %1677 = vmatprep.subr.bf16.mxu0 %v1543
        %1678 = vmatpush1.bf16.msra.mxu0 %v1542
        %1679 = vmatprep.subr.bf16.mxu0 %v1546
        %1680 = vmatpush1.bf16.msra.mxu0 %v1545
        %1681 = vmatprep.subr.bf16.mxu0 %v1549
        %1682 = vmatpush1.bf16.msra.mxu0 %v1548
        %1683 = vmatprep.subr.bf16.mxu0 %v1552
        %1684 = vmatpush1.bf16.msra.mxu0 %v1551
        %1685 = vmatprep.subr.bf16.mxu0 %v1555
        %1686 = vmatpush1.bf16.msra.mxu0 %v1554
        %1687 = vmatprep.subr.bf16.mxu0 %v1558
        %1688 = vmatpush1.bf16.msra.mxu0 %v1557
        %1689 = vmatprep.subr.bf16.mxu0 0
        %1690 = vmatpush1.bf16.msra.mxu0 0
        %1691 = vmatprep.subr.bf16.mxu0 0
        %1692 = vmatpush1.bf16.msra.mxu0 0
        %1693 = vmatprep.subr.bf16.mxu0 0
        %1694 = vmatpush1.bf16.msra.mxu0 0
        %1695 = vmatprep.subr.bf16.mxu0 0
        %1696 = vmatpush1.bf16.msra.mxu0 0
        %1697 = vmatprep.subr.bf16.mxu0 0
        %1698 = vmatpush1.bf16.msra.mxu0 0
        %1699 = vmatprep.subr.bf16.mxu0 0
        %1700 = vmatpush1.bf16.msra.mxu0 0
        %1701 = vmatprep.subr.bf16.mxu0 0
        %1702 = vmatpush1.bf16.msra.mxu0 0
        %1703 = vmatprep.subr.bf16.mxu0 0
        %1704 = vmatpush1.bf16.msra.mxu0 0
        %1705 = vmatprep.mubr.bf16.mxu0 0
        %1706 = vmatmul.mubr.bf16.gmra.mrb[0].mxu0 %v1134
        %v1707 = vpop.f32.mrb[0].mxu0
        %v1708 = vadd.f32 %v1667, %v1707
        %v1709 = vpop.f32.mrb[0].mxu0
        %v1710 = vadd.f32 %v1669, %v1709
        %v1711 = vpop.f32.mrb[0].mxu0
        %v1712 = vpop.f32.mrb[0].mxu0
        %1713 = vdwg.mxu0
        %1714 = vmatprep.subr.bf16.mxu0 0
        %1715 = vmatpush1.bf16.msra.mxu0 %v1490
        %1716 = vmatprep.subr.bf16.mxu0 0
        %1717 = vmatpush1.bf16.msra.mxu0 %v1493
        %1718 = vmatprep.subr.bf16.mxu0 0
        %1719 = vmatpush1.bf16.msra.mxu0 %v1496
        %1720 = vmatprep.subr.bf16.mxu0 0
        %1721 = vmatpush1.bf16.msra.mxu0 %v1499
        %1722 = vmatprep.subr.bf16.mxu0 0
        %1723 = vmatpush1.bf16.msra.mxu0 %v1502
        %1724 = vmatprep.subr.bf16.mxu0 0
        %1725 = vmatpush1.bf16.msra.mxu0 %v1505
        %1726 = vmatprep.subr.bf16.mxu0 0
        %1727 = vmatpush1.bf16.msra.mxu0 %v1508
        %1728 = vmatprep.subr.bf16.mxu0 0
        %1729 = vmatpush1.bf16.msra.mxu0 %v1511
        %1730 = vmatprep.subr.bf16.mxu0 0
        %1731 = vmatpush1.bf16.msra.mxu0 %v1514
        %1732 = vmatprep.subr.bf16.mxu0 0
        %1733 = vmatpush1.bf16.msra.mxu0 %v1517
        %1734 = vmatprep.subr.bf16.mxu0 0
        %1735 = vmatpush1.bf16.msra.mxu0 %v1520
        %1736 = vmatprep.subr.bf16.mxu0 0
        %1737 = vmatpush1.bf16.msra.mxu0 %v1523
        %1738 = vmatprep.subr.bf16.mxu0 0
        %1739 = vmatpush1.bf16.msra.mxu0 %v1526
        %1740 = vmatprep.subr.bf16.mxu0 0
        %1741 = vmatpush1.bf16.msra.mxu0 %v1529
        %1742 = vmatprep.subr.bf16.mxu0 0
        %1743 = vmatpush1.bf16.msra.mxu0 %v1532
        %1744 = vmatprep.subr.bf16.mxu0 0
        %1745 = vmatpush1.bf16.msra.mxu0 %v1535
        %1746 = vmatprep.mubr.bf16.mxu0 %v1133
        %1747 = vmatmul.mubr.bf16.gmra.mrb[0].mxu0 %v1132
        %v1748 = vpop.f32.mrb[0].mxu0
        %v1749 = vadd.f32 %v1244, %v1748
        %v1750 = vpop.f32.mrb[0].mxu0
        %v1751 = vpop.f32.mrb[0].mxu0
        %v1752 = vpop.f32.mrb[0].mxu0
        %1753 = vdwg.mxu0
        %1754 = vmatprep.subr.bf16.mxu0 0
        %1755 = vmatpush1.bf16.msra.mxu0 %v1538
        %1756 = vmatprep.subr.bf16.mxu0 0
        %1757 = vmatpush1.bf16.msra.mxu0 %v1541
        %1758 = vmatprep.subr.bf16.mxu0 0
        %1759 = vmatpush1.bf16.msra.mxu0 %v1544
        %1760 = vmatprep.subr.bf16.mxu0 0
        %1761 = vmatpush1.bf16.msra.mxu0 %v1547
        %1762 = vmatprep.subr.bf16.mxu0 0
        %1763 = vmatpush1.bf16.msra.mxu0 %v1550
        %1764 = vmatprep.subr.bf16.mxu0 0
        %1765 = vmatpush1.bf16.msra.mxu0 %v1553
        %1766 = vmatprep.subr.bf16.mxu0 0
        %1767 = vmatpush1.bf16.msra.mxu0 %v1556
        %1768 = vmatprep.subr.bf16.mxu0 0
        %1769 = vmatpush1.bf16.msra.mxu0 %v1559
        %1770 = vmatprep.subr.bf16.mxu0 0
        %1771 = vmatpush1.bf16.msra.mxu0 0
        %1772 = vmatprep.subr.bf16.mxu0 0
        %1773 = vmatpush1.bf16.msra.mxu0 0
        %1774 = vmatprep.subr.bf16.mxu0 0
        %1775 = vmatpush1.bf16.msra.mxu0 0
        %1776 = vmatprep.subr.bf16.mxu0 0
        %1777 = vmatpush1.bf16.msra.mxu0 0
        %1778 = vmatprep.subr.bf16.mxu0 0
        %1779 = vmatpush1.bf16.msra.mxu0 0
        %1780 = vmatprep.subr.bf16.mxu0 0
        %1781 = vmatpush1.bf16.msra.mxu0 0
        %1782 = vmatprep.subr.bf16.mxu0 0
        %1783 = vmatpush1.bf16.msra.mxu0 0
        %1784 = vmatprep.subr.bf16.mxu0 0
        %1785 = vmatpush1.bf16.msra.mxu0 0
        %1786 = vmatprep.mubr.bf16.mxu0 0
        %1787 = vmatmul.mubr.bf16.gmra.mrb[0].mxu0 %v1134
        %v1788 = vpop.f32.mrb[0].mxu0
        %v1789 = vadd.f32 %v1749, %v1788
        %v1790 = vpop.f32.mrb[0].mxu0
        %v1791 = vpop.f32.mrb[0].mxu0
        %v1792 = vpop.f32.mrb[0].mxu0
        %1793 = vdwg.mxu0
        %v1794 = vmax.f32 %v1708, 0.0
        %v1795 = vmax.f32 %v1710, 0.0
        %v1796 = vmax.f32 %v1789, 0.0
        %v1797 = vpack.c.bf16 %v1794, %v1794
        %v1798 = vpack.c.bf16 %v1795, %v1795
        %v1799 = vpack.c.bf16 %v1796, %v1796
        %v1800 = vld [vmem:[#allocation11] sm:$0xf]
        %v1801 = vld [vmem:[#allocation11 + $0x4] sm:$0xf]
        %v1802 = vld [vmem:[#allocation11 + $0x8] sm:$0xf]
        %v1803 = vld [vmem:[#allocation11 + $0xc] sm:$0xf]
        %v1804 = vld [vmem:[#allocation11 + $0x10] sm:$0xf]
        %v1805 = vld [vmem:[#allocation11 + $0x14] sm:$0xf]
        %v1806 = vld [vmem:[#allocation11 + $0x18] sm:$0xf]
        %v1807 = vld [vmem:[#allocation11 + $0x1c] sm:$0xf]
        %v1808 = vld [vmem:[#allocation11 + $0x20] sm:$0xf]
        %v1809 = vld [vmem:[#allocation11 + $0x24] sm:$0xf]
        %v1810 = vld [vmem:[#allocation11 + $0x28] sm:$0xf]
        %v1811 = vld [vmem:[#allocation11 + $0x2c] sm:$0xf]
        %v1812 = vld [vmem:[#allocation11 + $0x30] sm:$0xf]
        %v1813 = vld [vmem:[#allocation11 + $0x34] sm:$0xf]
        %v1814 = vld [vmem:[#allocation11 + $0x38] sm:$0xf]
        %v1815 = vld [vmem:[#allocation11 + $0x3c] sm:$0xf]
        %v1816 = vld [vmem:[#allocation11 + $0x40] sm:$0xf]
        %v1817 = vld [vmem:[#allocation11 + $0x44] sm:$0xf]
        %v1818 = vld [vmem:[#allocation11 + $0x48] sm:$0xf]
        %v1819 = vld [vmem:[#allocation11 + $0x4c] sm:$0xf]
        %v1820 = vld [vmem:[#allocation11 + $0x50] sm:$0xf]
        %v1821 = vld [vmem:[#allocation11 + $0x54] sm:$0xf]
        %v1822 = vld [vmem:[#allocation11 + $0x58] sm:$0xf]
        %v1823 = vld [vmem:[#allocation11 + $0x5c] sm:$0xf]
        %v1824 = vld [vmem:[#allocation11 + $0x60] sm:$0xf]
        %v1825 = vld [vmem:[#allocation11 + $0x64] sm:$0xf]
        %v1826 = vld [vmem:[#allocation11 + $0x68] sm:$0xf]
        %v1827 = vld [vmem:[#allocation11 + $0x6c] sm:$0xf]
        %v1828 = vld [vmem:[#allocation11 + $0x70] sm:$0xf]
        %v1829 = vld [vmem:[#allocation11 + $0x74] sm:$0xf]
        %v1830 = vld [vmem:[#allocation11 + $0x78] sm:$0xf]
        %v1831 = vld [vmem:[#allocation11 + $0x7c] sm:$0xf]
        %v1832 = vld [vmem:[#allocation11 + $0x80] sm:$0xf]
        %v1833 = vld [vmem:[#allocation11 + $0x84] sm:$0xf]
        %v1834 = vld [vmem:[#allocation11 + $0x88] sm:$0xf]
        %v1835 = vld [vmem:[#allocation11 + $0x8c] sm:$0xf]
        %v1836 = vld [vmem:[#allocation11 + $0x90] sm:$0xf]
        %v1837 = vld [vmem:[#allocation11 + $0x94] sm:$0xf]
        %v1838 = vld [vmem:[#allocation11 + $0x98] sm:$0xf]
        %v1839 = vld [vmem:[#allocation11 + $0x9c] sm:$0xf]
        %v1840 = vld [vmem:[#allocation11 + $0xa0] sm:$0xf]
        %v1841 = vld [vmem:[#allocation11 + $0xa4] sm:$0xf]
        %v1842 = vld [vmem:[#allocation11 + $0xa8] sm:$0xf]
        %v1843 = vld [vmem:[#allocation11 + $0xac] sm:$0xf]
        %v1844 = vld [vmem:[#allocation11 + $0xb0] sm:$0xf]
        %v1845 = vld [vmem:[#allocation11 + $0xb4] sm:$0xf]
        %v1846 = vld [vmem:[#allocation11 + $0xb8] sm:$0xf]
        %v1847 = vld [vmem:[#allocation11 + $0xbc] sm:$0xf]
        %v1848 = vld [vmem:[%s8] sm:$0x1]
        %v1850 = vlaneseq
        %v1851 = vshrl.u32 %v1850, 7
        %v1852 = vsub.s32 0, %v1851
        %v1853 = vrot.slane %v1848, %v1852
        %v1903 = vunpack.c.l.b16 %v1800
        %v1904 = vunpack.c.l.b16 %v1801
        %v1905 = vunpack.c.l.b16 %v1802
        %v1906 = vunpack.c.l.b16 %v1803
        %v1907 = vunpack.c.l.b16 %v1804
        %v1908 = vunpack.c.l.b16 %v1805
        %v1909 = vunpack.c.l.b16 %v1806
        %v1910 = vunpack.c.l.b16 %v1807
        %v1911 = vunpack.c.l.b16 %v1808
        %v1912 = vunpack.c.l.b16 %v1809
        %v1913 = vunpack.c.l.b16 %v1810
        %v1914 = vunpack.c.l.b16 %v1811
        %v1915 = vunpack.c.l.b16 %v1812
        %v1916 = vunpack.c.l.b16 %v1813
        %v1917 = vunpack.c.l.b16 %v1814
        %v1918 = vunpack.c.l.b16 %v1815
        %v1919 = vunpack.c.l.b16 %v1816
        %v1920 = vunpack.c.l.b16 %v1817
        %v1921 = vunpack.c.l.b16 %v1818
        %v1922 = vunpack.c.l.b16 %v1819
        %v1923 = vunpack.c.l.b16 %v1820
        %v1924 = vunpack.c.l.b16 %v1821
        %v1925 = vunpack.c.l.b16 %v1822
        %v1926 = vunpack.c.l.b16 %v1823
        %v1927 = vunpack.c.l.b16 %v1824
        %v1928 = vunpack.c.l.b16 %v1825
        %v1929 = vunpack.c.l.b16 %v1826
        %v1930 = vunpack.c.l.b16 %v1827
        %v1931 = vunpack.c.l.b16 %v1828
        %v1932 = vunpack.c.l.b16 %v1829
        %v1933 = vunpack.c.l.b16 %v1830
        %v1934 = vunpack.c.l.b16 %v1831
        %v1935 = vunpack.c.l.b16 %v1832
        %v1936 = vunpack.c.l.b16 %v1833
        %v1937 = vunpack.c.l.b16 %v1834
        %v1938 = vunpack.c.l.b16 %v1835
        %v1939 = vunpack.c.l.b16 %v1836
        %v1940 = vunpack.c.l.b16 %v1837
        %v1941 = vunpack.c.l.b16 %v1838
        %v1942 = vunpack.c.l.b16 %v1839
        %v1943 = vunpack.c.l.b16 %v1840
        %v1944 = vunpack.c.l.b16 %v1841
        %v1945 = vunpack.c.l.b16 %v1842
        %v1946 = vunpack.c.l.b16 %v1843
        %v1947 = vunpack.c.l.b16 %v1844
        %v1948 = vunpack.c.l.b16 %v1845
        %v1949 = vunpack.c.l.b16 %v1846
        %v1950 = vunpack.c.l.b16 %v1847
        %v1951 = vpack.c.b16 %v1904, %v1903
        %v1952 = vpack.c.b16 %v1906, %v1905
        %v1953 = vpack.c.b16 %v1908, %v1907
        %v1954 = vpack.c.b16 %v1910, %v1909
        %v1955 = vpack.c.b16 %v1912, %v1911
        %v1956 = vpack.c.b16 %v1914, %v1913
        %v1957 = vpack.c.b16 %v1916, %v1915
        %v1958 = vpack.c.b16 %v1918, %v1917
        %v1959 = vpack.c.b16 %v1920, %v1919
        %v1960 = vpack.c.b16 %v1922, %v1921
        %v1961 = vpack.c.b16 %v1924, %v1923
        %v1962 = vpack.c.b16 %v1926, %v1925
        %v1963 = vpack.c.b16 %v1928, %v1927
        %v1964 = vpack.c.b16 %v1930, %v1929
        %v1965 = vpack.c.b16 %v1932, %v1931
        %v1966 = vpack.c.b16 %v1934, %v1933
        %v1967 = vpack.c.b16 %v1936, %v1935
        %v1968 = vpack.c.b16 %v1938, %v1937
        %v1969 = vpack.c.b16 %v1940, %v1939
        %v1970 = vpack.c.b16 %v1942, %v1941
        %v1971 = vpack.c.b16 %v1944, %v1943
        %v1972 = vpack.c.b16 %v1946, %v1945
        %v1973 = vpack.c.b16 %v1948, %v1947
        %v1974 = vpack.c.b16 %v1950, %v1949
        %1999 = vmatprep.subr.bf16.mxu0 0
        %2000 = vmatpush1.bf16.msra.mxu0 %v1951
        %2001 = vmatprep.subr.bf16.mxu0 0
        %2002 = vmatpush1.bf16.msra.mxu0 %v1952
        %2003 = vmatprep.subr.bf16.mxu0 0
        %2004 = vmatpush1.bf16.msra.mxu0 %v1953
        %2005 = vmatprep.subr.bf16.mxu0 0
        %2006 = vmatpush1.bf16.msra.mxu0 %v1954
        %2007 = vmatprep.subr.bf16.mxu0 0
        %2008 = vmatpush1.bf16.msra.mxu0 %v1955
        %2009 = vmatprep.subr.bf16.mxu0 0
        %2010 = vmatpush1.bf16.msra.mxu0 %v1956
        %2011 = vmatprep.subr.bf16.mxu0 0
        %2012 = vmatpush1.bf16.msra.mxu0 %v1957
        %2013 = vmatprep.subr.bf16.mxu0 0
        %2014 = vmatpush1.bf16.msra.mxu0 %v1958
        %2015 = vmatprep.subr.bf16.mxu0 0
        %2016 = vmatpush1.bf16.msra.mxu0 %v1959
        %2017 = vmatprep.subr.bf16.mxu0 0
        %2018 = vmatpush1.bf16.msra.mxu0 %v1960
        %2019 = vmatprep.subr.bf16.mxu0 0
        %2020 = vmatpush1.bf16.msra.mxu0 %v1961
        %2021 = vmatprep.subr.bf16.mxu0 0
        %2022 = vmatpush1.bf16.msra.mxu0 %v1962
        %2023 = vmatprep.subr.bf16.mxu0 0
        %2024 = vmatpush1.bf16.msra.mxu0 %v1963
        %2025 = vmatprep.subr.bf16.mxu0 0
        %2026 = vmatpush1.bf16.msra.mxu0 %v1964
        %2027 = vmatprep.subr.bf16.mxu0 0
        %2028 = vmatpush1.bf16.msra.mxu0 %v1965
        %2029 = vmatprep.subr.bf16.mxu0 0
        %2030 = vmatpush1.bf16.msra.mxu0 %v1966
        %2031 = vmatprep.mubr.bf16.mxu0 %v1798
        %2032 = vmatmul.mubr.bf16.gmra.mrb[0].mxu0 %v1797
        %v2033 = vpop.f32.mrb[0].mxu0
        %v2034 = vadd.f32 %v1853, %v2033
        %v2035 = vpop.f32.mrb[0].mxu0
        %v2036 = vpop.f32.mrb[0].mxu0
        %v2037 = vpop.f32.mrb[0].mxu0
        %2038 = vdwg.mxu0
        %2039 = vmatprep.subr.bf16.mxu0 0
        %2040 = vmatpush1.bf16.msra.mxu0 %v1967
        %2041 = vmatprep.subr.bf16.mxu0 0
        %2042 = vmatpush1.bf16.msra.mxu0 %v1968
        %2043 = vmatprep.subr.bf16.mxu0 0
        %2044 = vmatpush1.bf16.msra.mxu0 %v1969
        %2045 = vmatprep.subr.bf16.mxu0 0
        %2046 = vmatpush1.bf16.msra.mxu0 %v1970
        %2047 = vmatprep.subr.bf16.mxu0 0
        %2048 = vmatpush1.bf16.msra.mxu0 %v1971
        %2049 = vmatprep.subr.bf16.mxu0 0
        %2050 = vmatpush1.bf16.msra.mxu0 %v1972
        %2051 = vmatprep.subr.bf16.mxu0 0
        %2052 = vmatpush1.bf16.msra.mxu0 %v1973
        %2053 = vmatprep.subr.bf16.mxu0 0
        %2054 = vmatpush1.bf16.msra.mxu0 %v1974
        %2055 = vmatprep.subr.bf16.mxu0 0
        %2056 = vmatpush1.bf16.msra.mxu0 0
        %2057 = vmatprep.subr.bf16.mxu0 0
        %2058 = vmatpush1.bf16.msra.mxu0 0
        %2059 = vmatprep.subr.bf16.mxu0 0
        %2060 = vmatpush1.bf16.msra.mxu0 0
        %2061 = vmatprep.subr.bf16.mxu0 0
        %2062 = vmatpush1.bf16.msra.mxu0 0
        %2063 = vmatprep.subr.bf16.mxu0 0
        %2064 = vmatpush1.bf16.msra.mxu0 0
        %2065 = vmatprep.subr.bf16.mxu0 0
        %2066 = vmatpush1.bf16.msra.mxu0 0
        %2067 = vmatprep.subr.bf16.mxu0 0
        %2068 = vmatpush1.bf16.msra.mxu0 0
        %2069 = vmatprep.subr.bf16.mxu0 0
        %2070 = vmatpush1.bf16.msra.mxu0 0
        %2071 = vmatprep.mubr.bf16.mxu0 0
        %2072 = vmatmul.mubr.bf16.gmra.mrb[0].mxu0 %v1799
        %v2073 = vpop.f32.mrb[0].mxu0
        %v2074 = vadd.f32 %v2034, %v2073
        %v2075 = vpop.f32.mrb[0].mxu0
        %v2076 = vpop.f32.mrb[0].mxu0
        %v2077 = vpop.f32.mrb[0].mxu0
        %2078 = vdwg.mxu0
        %2079 = vst [vmem:[%s462] sm:$0xff] %v2074
        %s2080 = sand.u32 %s243, 1
        %s2081 = scalar_lea.sflag [#allocation4], %s2080
        %s2082 = sand.u32 %s243, 1
        %s2083 = smul.addr %s2082, 8
        %s2084 = scalar_lea.vmem [#allocation13], %s2083
        // Predicated region
        $region81: #{tpu_custom_call.1} parent=55 // pred_check
          %p2085 = pneg %p253
        $region82: #{tpu_custom_call.1} parent=55 // pred_check_branch
          %2087 = sbr.rel (%p2085) target = $region84
        $region83: #{tpu_custom_call.1} parent=55 // pred_region
          %s2089 = ssub.s32 128, 128
          %2090 = vsyncadd %s2081, %s2089
          %s2091 = smul.addr %s31, 128
          %s2092 = scalar_lea.hbm %s9, %s2091
          %s2094 = sshll.u32 %s2084, 4
          %s2095 = int_to_ptr.vmem [resolvable:$true] %s2094
          %2097 = dma.vmem_to_hbm [thread:$0]  %s2095, 128, %s2092, %s2081
        $region84: #{tpu_custom_call.1} parent=55 // pred_fallthru
          _
      $region56: #{tpu_custom_call.1} parent=5 // pred_fallthru
        _
      %p2098 = scmp.le.s32.totalorder 2, %s26
      // Predicated region
      $region85: #{tpu_custom_call.1} parent=5 // pred_check
        %p2099 = pneg %p2098
      $region86: #{tpu_custom_call.1} parent=5 // pred_check_branch
        %2101 = sbr.rel (%p2099) target = $region88
      $region87: #{tpu_custom_call.1} parent=5 // pred_region
        %s2102 = ssub.s32 %s26, 2
        // Predicated region
        $region89: #{tpu_custom_call.1} parent=87 // pred_check
          %p2103 = pneg %p259
        $region90: #{tpu_custom_call.1} parent=87 // pred_check_branch
          %2105 = sbr.rel (%p2103) target = $region92
        $region91: #{tpu_custom_call.1} parent=87 // pred_region
          %s2106 = sand.u32 %s244, 1
          %s2107 = scalar_lea.sflag [#allocation4], %s2106
          %s2108 = sand.u32 %s244, 1
          %s2109 = smul.addr %s2108, 8
          %s2110 = scalar_lea.vmem [#allocation13], %s2109
          %2111 = dma.done %s2107, 128
        $region92: #{tpu_custom_call.1} parent=87 // pred_fallthru
          _
      $region88: #{tpu_custom_call.1} parent=5 // pred_fallthru
        _
    $region6: #{tpu_custom_call.1} parent=1 // loop_footer
      %s30 = sadd.s32 1, %s26
    $region7: #{tpu_custom_call.1} parent=1 // loop_footer_branch
      %25 = sbr.rel target = $region3
    $region8: #{tpu_custom_call.1} parent=1 // loop_exit
      _
    %2112 = vsyncpa [#allocation3], 1
    %s2113 = scalar_lea.sflag [#allocation3], 1
    %2114 = vsyncpa %s2113, 1
    %2115 = vsyncpa [#allocation6], 1
    %s2116 = scalar_lea.sflag [#allocation6], 1
    %2117 = vsyncpa %s2116, 1
    %2118 = vsyncpa [#allocation9], 1
    %2119 = vsyncpa [#allocation12], 1
    %2120 = vsyncpa [#allocation4], 1
    %s2121 = scalar_lea.sflag [#allocation4], 1
    %2122 = vsyncpa %s2121, 1

</llo_original>
